<compile_context>
chip_gen: v7x
topology: tpu7x:2x2x1
jax: 0.10.0
libtpu: 0.0.40
codegen_flags: <defaults>
</compile_context>

<pallas_src>
import jax
import jax.numpy as jnp
from jax.experimental import pallas as pl
from jax.experimental.pallas import tpu as pltpu


KSIZE = 5
PAD = (KSIZE - 1) // 2

# Conservative VMEM working-set budget for the fused path (fits the default
# scoped-VMEM limit on v5e/v6e/v7x with double-buffering headroom).
_FUSED_VMEM_BUDGET = 12 * 1024 * 1024


# ---------------------------------------------------------------------------
# Fused single-pass kernel: pool + 5x5 conv + ReLU + sigmoid + rescale.
# ---------------------------------------------------------------------------
def sab_fused_kernel(w_ref, x_ref, o_ref, pad_ref):
    # w_ref  : (2*5*5,) f32 SMEM   conv weights (flattened from (1, 2, 5, 5))
    # x_ref  : (1, C, H, W)        per-batch input block (input dtype)
    # o_ref  : (1, C, H, W)        per-batch output block (input dtype)
    # pad_ref: (2, H+4, W+4) f32   zero-padded pooled maps (VMEM scratch)
    H = o_ref.shape[2]
    W = o_ref.shape[3]

    x = x_ref[0]                                      # (C, H, W)
    xf = x.astype(jnp.float32)

    # Channel pool (reduction over C = cheap per-lane max/add tree).
    cmax = jnp.max(xf, axis=0)                        # (H, W)
    cmean = jnp.mean(xf, axis=0)                      # (H, W)

    # Zero-padded pooled maps built in VMEM scratch (interior masked store).
    pad_ref[...] = jnp.zeros_like(pad_ref)
    pad_ref[0, PAD:PAD + H, PAD:PAD + W] = cmax
    pad_ref[1, PAD:PAD + H, PAD:PAD + W] = cmean

    # 5x5 conv (2 -> 1, bias=False) = 50 shifted multiply-adds with scalar
    # weights read from SMEM; stays on the VPU (no MXU / im2col traffic).
    acc = jnp.zeros((H, W), jnp.float32)
    for c in range(2):
        for ki in range(KSIZE):
            for kj in range(KSIZE):
                w = w_ref[(c * KSIZE + ki) * KSIZE + kj]        # SMEM scalar
                acc = acc + w * pad_ref[c, ki:ki + H, kj:kj + W]

    acc = jnp.maximum(acc, 0.0)                       # Basic() applies ReLU
    scale = jax.nn.sigmoid(acc)                       # exp runs on the EUP
    o_ref[0] = (x * scale[None, :, :].astype(x.dtype)).astype(o_ref.dtype)


def _sab_forward_fused(x_nchw, w_conv):
    N, C, H, W = x_nchw.shape
    w_flat = w_conv.reshape(-1).astype(jnp.float32)
    return pl.pallas_call(
        sab_fused_kernel,
        out_shape=jax.ShapeDtypeStruct((N, C, H, W), x_nchw.dtype),
        grid_spec=pltpu.PrefetchScalarGridSpec(
            num_scalar_prefetch=0,
            grid=(N,),
            in_specs=[
                pl.BlockSpec(memory_space=pltpu.MemorySpace.SMEM),
                pl.BlockSpec((1, C, H, W), lambda n: (n, 0, 0, 0)),
            ],
            out_specs=pl.BlockSpec((1, C, H, W), lambda n: (n, 0, 0, 0)),
            scratch_shapes=[
                pltpu.VMEM((2, H + 2 * PAD, W + 2 * PAD), jnp.float32)],
        ),
        compiler_params=pltpu.CompilerParams(
            dimension_semantics=("parallel",)),
    )(w_flat, x_nchw)


# ---------------------------------------------------------------------------
# Fallback 3-stage pipeline (validated previously).
# ---------------------------------------------------------------------------
def _pick_hw_tile(hw: int, c: int, itemsize: int) -> int:
    """Largest multiple of 128 dividing hw, sized so a (C, T) tile stays small."""
    if hw % 128 != 0:
        # TODO(synk): pad HW up to a multiple of 128 for large non-aligned
        # spatial sizes; for now fall back to one full-HW block (full-dim
        # exemption from the (8,128) rule).
        return hw
    max_lanes = max(128, ((1 << 20) // max(1, c * itemsize)) // 128 * 128)
    max_lanes = min(max_lanes, 2048)
    t = min(hw, max_lanes)
    t -= t % 128
    if t <= 0:
        t = 128
    while hw % t:
        t -= 128
    return t


def sab_pool_kernel(x_ref, p_ref):
    # x_ref: (1, C, T) input dtype ; p_ref: (1, 2, T) f32  [row0=max, row1=mean]
    x = x_ref[0]                                               # (C, T)
    p_ref[0, 0:1, :] = jnp.max(x, axis=0, keepdims=True).astype(jnp.float32)
    p_ref[0, 1:2, :] = jnp.mean(x, axis=0, dtype=jnp.float32, keepdims=True)


def sab_conv_scale_kernel(w_ref, p_ref, s_ref):
    # w_ref: (2*5*5,) f32 SMEM ; p_ref: (1, 2, H+4, W+4) f32 zero-padded pool
    # s_ref: (1, 1, H, W) f32 sigmoid attention map.
    H = s_ref.shape[2]
    W = s_ref.shape[3]
    acc = jnp.zeros((H, W), jnp.float32)
    for c in range(2):
        for ki in range(KSIZE):
            for kj in range(KSIZE):
                w = w_ref[(c * KSIZE + ki) * KSIZE + kj]       # SMEM scalar
                acc = acc + w * p_ref[0, c, ki:ki + H, kj:kj + W]
    acc = jnp.maximum(acc, 0.0)
    s_ref[0, 0, :, :] = jax.nn.sigmoid(acc)


def sab_rescale_kernel(x_ref, s_ref, o_ref):
    # x_ref: (1, C, T) input dtype ; s_ref: (1, 1, T) f32 ; o_ref: (1, C, T)
    o_ref[...] = x_ref[...] * s_ref[...].astype(o_ref.dtype)


def _sab_forward_staged(x_nchw, w_conv):
    N, C, H, W = x_nchw.shape
    HW = H * W
    T = _pick_hw_tile(HW, C, x_nchw.dtype.itemsize)
    n_t = HW // T

    x_flat = x_nchw.reshape(N, C, HW)

    # ---- Stage 1: channel pool -------------------------------------------
    pooled = pl.pallas_call(
        sab_pool_kernel,
        out_shape=jax.ShapeDtypeStruct((N, 2, HW), jnp.float32),
        grid_spec=pltpu.PrefetchScalarGridSpec(
            num_scalar_prefetch=0,
            grid=(N, n_t),
            in_specs=[pl.BlockSpec((1, C, T), lambda n, t: (n, 0, t))],
            out_specs=pl.BlockSpec((1, 2, T), lambda n, t: (n, 0, t)),
        ),
        compiler_params=pltpu.CompilerParams(
            dimension_semantics=("parallel", "parallel")),
    )(x_flat)

    # ---- Stage 2: 5x5 conv + ReLU + sigmoid on the tiny pooled map --------
    pooled_padded = jnp.pad(
        pooled.reshape(N, 2, H, W),
        ((0, 0), (0, 0), (PAD, PAD), (PAD, PAD)))
    w_flat = w_conv.reshape(-1).astype(jnp.float32)

    scale = pl.pallas_call(
        sab_conv_scale_kernel,
        out_shape=jax.ShapeDtypeStruct((N, 1, H, W), jnp.float32),
        grid_spec=pltpu.PrefetchScalarGridSpec(
            num_scalar_prefetch=0,
            grid=(N,),
            in_specs=[
                pl.BlockSpec(memory_space=pltpu.MemorySpace.SMEM),
                pl.BlockSpec((1, 2, H + 2 * PAD, W + 2 * PAD),
                             lambda n: (n, 0, 0, 0)),
            ],
            out_specs=pl.BlockSpec((1, 1, H, W), lambda n: (n, 0, 0, 0)),
        ),
        compiler_params=pltpu.CompilerParams(
            dimension_semantics=("parallel",)),
    )(w_flat, pooled_padded)

    # ---- Stage 3: rescale x by the attention map --------------------------
    out = pl.pallas_call(
        sab_rescale_kernel,
        out_shape=jax.ShapeDtypeStruct((N, C, HW), x_nchw.dtype),
        grid_spec=pltpu.PrefetchScalarGridSpec(
            num_scalar_prefetch=0,
            grid=(N, n_t),
            in_specs=[
                pl.BlockSpec((1, C, T), lambda n, t: (n, 0, t)),
                pl.BlockSpec((1, 1, T), lambda n, t: (n, 0, t)),
            ],
            out_specs=pl.BlockSpec((1, C, T), lambda n, t: (n, 0, t)),
        ),
        compiler_params=pltpu.CompilerParams(
            dimension_semantics=("parallel", "parallel")),
    )(x_flat, scale.reshape(N, 1, HW))

    return out.reshape(N, C, H, W)


# ---------------------------------------------------------------------------
# Public entry point: fused single-pass when it fits, staged pipeline otherwise.
# ---------------------------------------------------------------------------
def sab_forward(x_nchw, w_conv):
    """x_nchw: (N, C, H, W); w_conv: (1, 2, 5, 5) conv weight (bias=False)."""
    N, C, H, W = x_nchw.shape
    itemsize = x_nchw.dtype.itemsize
    # Fused working set: double-buffered input + output blocks + padded scratch.
    fused_bytes = (2 * 2 * C * H * W * itemsize
                   + 2 * (H + 2 * PAD) * (W + 2 * PAD) * 4)
    if fused_bytes <= _FUSED_VMEM_BUDGET:
        try:
            out = _sab_forward_fused(x_nchw, w_conv)
            return jax.block_until_ready(out)
        except Exception:
            # Graceful degradation: if the fused kernel's in-kernel padded
            # store is rejected by the Mosaic lowering on this TPU generation,
            # fall back to the validated 3-stage lane-dense pipeline.
            pass
    return _sab_forward_staged(x_nchw, w_conv)


def sab_reference(x, w_conv):
    # Pure-JAX reference of the PyTorch SAB forward.
    cmax = jnp.max(x, axis=1, keepdims=True)
    cmean = jnp.mean(x, axis=1, keepdims=True)
    pool = jnp.concatenate([cmax, cmean], axis=1)              # (N, 2, H, W)
    conv = jax.lax.conv_general_dilated(
        pool, w_conv, window_strides=(1, 1),
        padding=((PAD, PAD), (PAD, PAD)),
        dimension_numbers=("NCHW", "OIHW", "NCHW"))            # (N, 1, H, W)
    scale = jax.nn.sigmoid(jnp.maximum(conv, 0.0))
    return x * scale


if __name__ == "__main__":
    key = jax.random.PRNGKey(0)
    k_x, k_w = jax.random.split(key, 2)

    N, C, H, W = 2, 4, 16, 16
    x = jax.random.normal(k_x, (N, C, H, W), dtype=jnp.float32)
    # Deterministic synthetic weight for the 5x5 spatial conv (bias=False).
    w_conv = jax.random.normal(k_w, (1, 2, KSIZE, KSIZE), dtype=jnp.float32) * 0.1

    out = sab_forward(x, w_conv)
    out = jax.block_until_ready(out)

    ref = sab_reference(x, w_conv)
    assert out.shape == (N, C, H, W)
    assert jnp.allclose(out, ref, atol=1e-4, rtol=1e-4), "mismatch vs reference"

    print("KERNEL_OK")
</pallas_src>

<mosaic_0001>
module attributes {stable_mosaic.version = 11 : i64} {
  func.func @sab_fused_kernel(%arg0: i32, %arg1: memref<50xf32, #tpu.memory_space<smem>>, %arg2: memref<1x4x16x16xf32, #tpu.memory_space<vmem>>, %arg3: memref<1x4x16x16xf32, #tpu.memory_space<vmem>>, %arg4: memref<2x20x20xf32, #tpu.memory_space<vmem>>) attributes {dimension_semantics = [#tpu.dimension_semantics<parallel>], iteration_bounds = array<i64: 2>, scalar_prefetch = 0 : i64, scratch_operands = 1 : i64, tpu.core_type = #tpu.core_type<tc>, window_params = [{transform_indices = @transform_0, window_bounds = array<i64: 50>}, {transform_indices = @transform_1, window_bounds = array<i64: 1, 4, 16, 16>}, {transform_indices = @transform_2, window_bounds = array<i64: 1, 4, 16, 16>}]} {
    %c0 = arith.constant 0 : index
    %c0_0 = arith.constant 0 : index
    %c0_1 = arith.constant 0 : index
    %c0_2 = arith.constant 0 : index
    %0 = vector.load %arg2[%c0, %c0_0, %c0_1, %c0_2] : memref<1x4x16x16xf32, #tpu.memory_space<vmem>>, vector<1x4x16x16xf32>
    %1 = vector.shape_cast %0 : vector<1x4x16x16xf32> to vector<4x16x16xf32>
    %cst = arith.constant dense<0xFF800000> : vector<16x16xf32>
    %2 = vector.multi_reduction <maximumf>, %1, %cst [0] : vector<4x16x16xf32> to vector<16x16xf32>
    %cst_3 = arith.constant dense<0.000000e+00> : vector<16x16xf32>
    %3 = vector.multi_reduction <add>, %1, %cst_3 [0] : vector<4x16x16xf32> to vector<16x16xf32>
    %cst_4 = arith.constant 4.000000e+00 : f32
    %4 = vector.broadcast %cst_4 : f32 to vector<16x16xf32>
    %5 = arith.divf %3, %4 : vector<16x16xf32>
    %cst_5 = arith.constant 0.000000e+00 : f32
    %6 = vector.broadcast %cst_5 : f32 to vector<2x20x20xf32>
    %c0_6 = arith.constant 0 : index
    %c0_7 = arith.constant 0 : index
    %c0_8 = arith.constant 0 : index
    %7 = vector.load %arg4[%c0_6, %c0_7, %c0_8] : memref<2x20x20xf32, #tpu.memory_space<vmem>>, vector<2x20x20xf32>
    tpu.vector_store %arg4[%c0_6, %c0_7, %c0_8], %6 {strides = array<i32>} : memref<2x20x20xf32, #tpu.memory_space<vmem>>, vector<2x20x20xf32>,
    %c0_9 = arith.constant 0 : index
    %c2 = arith.constant 2 : index
    %c2_10 = arith.constant 2 : index
    %8 = vector.load %arg4[%c0_9, %c2, %c2_10] : memref<2x20x20xf32, #tpu.memory_space<vmem>>, vector<1x16x16xf32>
    %9 = vector.shape_cast %8 : vector<1x16x16xf32> to vector<16x16xf32>
    %10 = vector.shape_cast %2 : vector<16x16xf32> to vector<1x16x16xf32>
    tpu.vector_store %arg4[%c0_9, %c2, %c2_10], %10 {strides = array<i32>} : memref<2x20x20xf32, #tpu.memory_space<vmem>>, vector<1x16x16xf32>,
    %c1 = arith.constant 1 : index
    %c2_11 = arith.constant 2 : index
    %c2_12 = arith.constant 2 : index
    %11 = vector.load %arg4[%c1, %c2_11, %c2_12] : memref<2x20x20xf32, #tpu.memory_space<vmem>>, vector<1x16x16xf32>
    %12 = vector.shape_cast %11 : vector<1x16x16xf32> to vector<16x16xf32>
    %13 = vector.shape_cast %5 : vector<16x16xf32> to vector<1x16x16xf32>
    tpu.vector_store %arg4[%c1, %c2_11, %c2_12], %13 {strides = array<i32>} : memref<2x20x20xf32, #tpu.memory_space<vmem>>, vector<1x16x16xf32>,
    %cst_13 = arith.constant 0.000000e+00 : f32
    %14 = vector.broadcast %cst_13 : f32 to vector<16x16xf32>
    %c0_14 = arith.constant 0 : index
    %15 = memref.load %arg1[%c0_14] : memref<50xf32, #tpu.memory_space<smem>>
    %c0_15 = arith.constant 0 : index
    %c0_16 = arith.constant 0 : index
    %c0_17 = arith.constant 0 : index
    %16 = vector.load %arg4[%c0_15, %c0_16, %c0_17] : memref<2x20x20xf32, #tpu.memory_space<vmem>>, vector<1x16x16xf32>
    %17 = vector.shape_cast %16 : vector<1x16x16xf32> to vector<16x16xf32>
    %18 = vector.broadcast %15 : f32 to vector<16x16xf32>
    %19 = arith.mulf %18, %17 : vector<16x16xf32>
    %20 = arith.addf %14, %19 : vector<16x16xf32>
    %c1_18 = arith.constant 1 : index
    %21 = memref.load %arg1[%c1_18] : memref<50xf32, #tpu.memory_space<smem>>
    %c0_19 = arith.constant 0 : index
    %c0_20 = arith.constant 0 : index
    %c1_21 = arith.constant 1 : index
    %22 = vector.load %arg4[%c0_19, %c0_20, %c1_21] : memref<2x20x20xf32, #tpu.memory_space<vmem>>, vector<1x16x16xf32>
    %23 = vector.shape_cast %22 : vector<1x16x16xf32> to vector<16x16xf32>
    %24 = vector.broadcast %21 : f32 to vector<16x16xf32>
    %25 = arith.mulf %24, %23 : vector<16x16xf32>
    %26 = arith.addf %20, %25 : vector<16x16xf32>
    %c2_22 = arith.constant 2 : index
    %27 = memref.load %arg1[%c2_22] : memref<50xf32, #tpu.memory_space<smem>>
    %c0_23 = arith.constant 0 : index
    %c0_24 = arith.constant 0 : index
    %c2_25 = arith.constant 2 : index
    %28 = vector.load %arg4[%c0_23, %c0_24, %c2_25] : memref<2x20x20xf32, #tpu.memory_space<vmem>>, vector<1x16x16xf32>
    %29 = vector.shape_cast %28 : vector<1x16x16xf32> to vector<16x16xf32>
    %30 = vector.broadcast %27 : f32 to vector<16x16xf32>
    %31 = arith.mulf %30, %29 : vector<16x16xf32>
    %32 = arith.addf %26, %31 : vector<16x16xf32>
    %c3 = arith.constant 3 : index
    %33 = memref.load %arg1[%c3] : memref<50xf32, #tpu.memory_space<smem>>
    %c0_26 = arith.constant 0 : index
    %c0_27 = arith.constant 0 : index
    %c3_28 = arith.constant 3 : index
    %34 = vector.load %arg4[%c0_26, %c0_27, %c3_28] : memref<2x20x20xf32, #tpu.memory_space<vmem>>, vector<1x16x16xf32>
    %35 = vector.shape_cast %34 : vector<1x16x16xf32> to vector<16x16xf32>
    %36 = vector.broadcast %33 : f32 to vector<16x16xf32>
    %37 = arith.mulf %36, %35 : vector<16x16xf32>
    %38 = arith.addf %32, %37 : vector<16x16xf32>
    %c4 = arith.constant 4 : index
    %39 = memref.load %arg1[%c4] : memref<50xf32, #tpu.memory_space<smem>>
    %c0_29 = arith.constant 0 : index
    %c0_30 = arith.constant 0 : index
    %c4_31 = arith.constant 4 : index
    %40 = vector.load %arg4[%c0_29, %c0_30, %c4_31] : memref<2x20x20xf32, #tpu.memory_space<vmem>>, vector<1x16x16xf32>
    %41 = vector.shape_cast %40 : vector<1x16x16xf32> to vector<16x16xf32>
    %42 = vector.broadcast %39 : f32 to vector<16x16xf32>
    %43 = arith.mulf %42, %41 : vector<16x16xf32>
    %44 = arith.addf %38, %43 : vector<16x16xf32>
    %c5 = arith.constant 5 : index
    %45 = memref.load %arg1[%c5] : memref<50xf32, #tpu.memory_space<smem>>
    %c0_32 = arith.constant 0 : index
    %c1_33 = arith.constant 1 : index
    %c0_34 = arith.constant 0 : index
    %46 = vector.load %arg4[%c0_32, %c1_33, %c0_34] : memref<2x20x20xf32, #tpu.memory_space<vmem>>, vector<1x16x16xf32>
    %47 = vector.shape_cast %46 : vector<1x16x16xf32> to vector<16x16xf32>
    %48 = vector.broadcast %45 : f32 to vector<16x16xf32>
    %49 = arith.mulf %48, %47 : vector<16x16xf32>
    %50 = arith.addf %44, %49 : vector<16x16xf32>
    %c6 = arith.constant 6 : index
    %51 = memref.load %arg1[%c6] : memref<50xf32, #tpu.memory_space<smem>>
    %c0_35 = arith.constant 0 : index
    %c1_36 = arith.constant 1 : index
    %c1_37 = arith.constant 1 : index
    %52 = vector.load %arg4[%c0_35, %c1_36, %c1_37] : memref<2x20x20xf32, #tpu.memory_space<vmem>>, vector<1x16x16xf32>
    %53 = vector.shape_cast %52 : vector<1x16x16xf32> to vector<16x16xf32>
    %54 = vector.broadcast %51 : f32 to vector<16x16xf32>
    %55 = arith.mulf %54, %53 : vector<16x16xf32>
    %56 = arith.addf %50, %55 : vector<16x16xf32>
    %c7 = arith.constant 7 : index
    %57 = memref.load %arg1[%c7] : memref<50xf32, #tpu.memory_space<smem>>
    %c0_38 = arith.constant 0 : index
    %c1_39 = arith.constant 1 : index
    %c2_40 = arith.constant 2 : index
    %58 = vector.load %arg4[%c0_38, %c1_39, %c2_40] : memref<2x20x20xf32, #tpu.memory_space<vmem>>, vector<1x16x16xf32>
    %59 = vector.shape_cast %58 : vector<1x16x16xf32> to vector<16x16xf32>
    %60 = vector.broadcast %57 : f32 to vector<16x16xf32>
    %61 = arith.mulf %60, %59 : vector<16x16xf32>
    %62 = arith.addf %56, %61 : vector<16x16xf32>
    %c8 = arith.constant 8 : index
    %63 = memref.load %arg1[%c8] : memref<50xf32, #tpu.memory_space<smem>>
    %c0_41 = arith.constant 0 : index
    %c1_42 = arith.constant 1 : index
    %c3_43 = arith.constant 3 : index
    %64 = vector.load %arg4[%c0_41, %c1_42, %c3_43] : memref<2x20x20xf32, #tpu.memory_space<vmem>>, vector<1x16x16xf32>
    %65 = vector.shape_cast %64 : vector<1x16x16xf32> to vector<16x16xf32>
    %66 = vector.broadcast %63 : f32 to vector<16x16xf32>
    %67 = arith.mulf %66, %65 : vector<16x16xf32>
    %68 = arith.addf %62, %67 : vector<16x16xf32>
    %c9 = arith.constant 9 : index
    %69 = memref.load %arg1[%c9] : memref<50xf32, #tpu.memory_space<smem>>
    %c0_44 = arith.constant 0 : index
    %c1_45 = arith.constant 1 : index
    %c4_46 = arith.constant 4 : index
    %70 = vector.load %arg4[%c0_44, %c1_45, %c4_46] : memref<2x20x20xf32, #tpu.memory_space<vmem>>, vector<1x16x16xf32>
    %71 = vector.shape_cast %70 : vector<1x16x16xf32> to vector<16x16xf32>
    %72 = vector.broadcast %69 : f32 to vector<16x16xf32>
    %73 = arith.mulf %72, %71 : vector<16x16xf32>
    %74 = arith.addf %68, %73 : vector<16x16xf32>
    %c10 = arith.constant 10 : index
    %75 = memref.load %arg1[%c10] : memref<50xf32, #tpu.memory_space<smem>>
    %c0_47 = arith.constant 0 : index
    %c2_48 = arith.constant 2 : index
    %c0_49 = arith.constant 0 : index
    %76 = vector.load %arg4[%c0_47, %c2_48, %c0_49] : memref<2x20x20xf32, #tpu.memory_space<vmem>>, vector<1x16x16xf32>
    %77 = vector.shape_cast %76 : vector<1x16x16xf32> to vector<16x16xf32>
    %78 = vector.broadcast %75 : f32 to vector<16x16xf32>
    %79 = arith.mulf %78, %77 : vector<16x16xf32>
    %80 = arith.addf %74, %79 : vector<16x16xf32>
    %c11 = arith.constant 11 : index
    %81 = memref.load %arg1[%c11] : memref<50xf32, #tpu.memory_space<smem>>
    %c0_50 = arith.constant 0 : index
    %c2_51 = arith.constant 2 : index
    %c1_52 = arith.constant 1 : index
    %82 = vector.load %arg4[%c0_50, %c2_51, %c1_52] : memref<2x20x20xf32, #tpu.memory_space<vmem>>, vector<1x16x16xf32>
    %83 = vector.shape_cast %82 : vector<1x16x16xf32> to vector<16x16xf32>
    %84 = vector.broadcast %81 : f32 to vector<16x16xf32>
    %85 = arith.mulf %84, %83 : vector<16x16xf32>
    %86 = arith.addf %80, %85 : vector<16x16xf32>
    %c12 = arith.constant 12 : index
    %87 = memref.load %arg1[%c12] : memref<50xf32, #tpu.memory_space<smem>>
    %c0_53 = arith.constant 0 : index
    %c2_54 = arith.constant 2 : index
    %c2_55 = arith.constant 2 : index
    %88 = vector.load %arg4[%c0_53, %c2_54, %c2_55] : memref<2x20x20xf32, #tpu.memory_space<vmem>>, vector<1x16x16xf32>
    %89 = vector.shape_cast %88 : vector<1x16x16xf32> to vector<16x16xf32>
    %90 = vector.broadcast %87 : f32 to vector<16x16xf32>
    %91 = arith.mulf %90, %89 : vector<16x16xf32>
    %92 = arith.addf %86, %91 : vector<16x16xf32>
    %c13 = arith.constant 13 : index
    %93 = memref.load %arg1[%c13] : memref<50xf32, #tpu.memory_space<smem>>
    %c0_56 = arith.constant 0 : index
    %c2_57 = arith.constant 2 : index
    %c3_58 = arith.constant 3 : index
    %94 = vector.load %arg4[%c0_56, %c2_57, %c3_58] : memref<2x20x20xf32, #tpu.memory_space<vmem>>, vector<1x16x16xf32>
    %95 = vector.shape_cast %94 : vector<1x16x16xf32> to vector<16x16xf32>
    %96 = vector.broadcast %93 : f32 to vector<16x16xf32>
    %97 = arith.mulf %96, %95 : vector<16x16xf32>
    %98 = arith.addf %92, %97 : vector<16x16xf32>
    %c14 = arith.constant 14 : index
    %99 = memref.load %arg1[%c14] : memref<50xf32, #tpu.memory_space<smem>>
    %c0_59 = arith.constant 0 : index
    %c2_60 = arith.constant 2 : index
    %c4_61 = arith.constant 4 : index
    %100 = vector.load %arg4[%c0_59, %c2_60, %c4_61] : memref<2x20x20xf32, #tpu.memory_space<vmem>>, vector<1x16x16xf32>
    %101 = vector.shape_cast %100 : vector<1x16x16xf32> to vector<16x16xf32>
    %102 = vector.broadcast %99 : f32 to vector<16x16xf32>
    %103 = arith.mulf %102, %101 : vector<16x16xf32>
    %104 = arith.addf %98, %103 : vector<16x16xf32>
    %c15 = arith.constant 15 : index
    %105 = memref.load %arg1[%c15] : memref<50xf32, #tpu.memory_space<smem>>
    %c0_62 = arith.constant 0 : index
    %c3_63 = arith.constant 3 : index
    %c0_64 = arith.constant 0 : index
    %106 = vector.load %arg4[%c0_62, %c3_63, %c0_64] : memref<2x20x20xf32, #tpu.memory_space<vmem>>, vector<1x16x16xf32>
    %107 = vector.shape_cast %106 : vector<1x16x16xf32> to vector<16x16xf32>
    %108 = vector.broadcast %105 : f32 to vector<16x16xf32>
    %109 = arith.mulf %108, %107 : vector<16x16xf32>
    %110 = arith.addf %104, %109 : vector<16x16xf32>
    %c16 = arith.constant 16 : index
    %111 = memref.load %arg1[%c16] : memref<50xf32, #tpu.memory_space<smem>>
    %c0_65 = arith.constant 0 : index
    %c3_66 = arith.constant 3 : index
    %c1_67 = arith.constant 1 : index
    %112 = vector.load %arg4[%c0_65, %c3_66, %c1_67] : memref<2x20x20xf32, #tpu.memory_space<vmem>>, vector<1x16x16xf32>
    %113 = vector.shape_cast %112 : vector<1x16x16xf32> to vector<16x16xf32>
    %114 = vector.broadcast %111 : f32 to vector<16x16xf32>
    %115 = arith.mulf %114, %113 : vector<16x16xf32>
    %116 = arith.addf %110, %115 : vector<16x16xf32>
    %c17 = arith.constant 17 : index
    %117 = memref.load %arg1[%c17] : memref<50xf32, #tpu.memory_space<smem>>
    %c0_68 = arith.constant 0 : index
    %c3_69 = arith.constant 3 : index
    %c2_70 = arith.constant 2 : index
    %118 = vector.load %arg4[%c0_68, %c3_69, %c2_70] : memref<2x20x20xf32, #tpu.memory_space<vmem>>, vector<1x16x16xf32>
    %119 = vector.shape_cast %118 : vector<1x16x16xf32> to vector<16x16xf32>
    %120 = vector.broadcast %117 : f32 to vector<16x16xf32>
    %121 = arith.mulf %120, %119 : vector<16x16xf32>
    %122 = arith.addf %116, %121 : vector<16x16xf32>
    %c18 = arith.constant 18 : index
    %123 = memref.load %arg1[%c18] : memref<50xf32, #tpu.memory_space<smem>>
    %c0_71 = arith.constant 0 : index
    %c3_72 = arith.constant 3 : index
    %c3_73 = arith.constant 3 : index
    %124 = vector.load %arg4[%c0_71, %c3_72, %c3_73] : memref<2x20x20xf32, #tpu.memory_space<vmem>>, vector<1x16x16xf32>
    %125 = vector.shape_cast %124 : vector<1x16x16xf32> to vector<16x16xf32>
    %126 = vector.broadcast %123 : f32 to vector<16x16xf32>
    %127 = arith.mulf %126, %125 : vector<16x16xf32>
    %128 = arith.addf %122, %127 : vector<16x16xf32>
    %c19 = arith.constant 19 : index
    %129 = memref.load %arg1[%c19] : memref<50xf32, #tpu.memory_space<smem>>
    %c0_74 = arith.constant 0 : index
    %c3_75 = arith.constant 3 : index
    %c4_76 = arith.constant 4 : index
    %130 = vector.load %arg4[%c0_74, %c3_75, %c4_76] : memref<2x20x20xf32, #tpu.memory_space<vmem>>, vector<1x16x16xf32>
    %131 = vector.shape_cast %130 : vector<1x16x16xf32> to vector<16x16xf32>
    %132 = vector.broadcast %129 : f32 to vector<16x16xf32>
    %133 = arith.mulf %132, %131 : vector<16x16xf32>
    %134 = arith.addf %128, %133 : vector<16x16xf32>
    %c20 = arith.constant 20 : index
    %135 = memref.load %arg1[%c20] : memref<50xf32, #tpu.memory_space<smem>>
    %c0_77 = arith.constant 0 : index
    %c4_78 = arith.constant 4 : index
    %c0_79 = arith.constant 0 : index
    %136 = vector.load %arg4[%c0_77, %c4_78, %c0_79] : memref<2x20x20xf32, #tpu.memory_space<vmem>>, vector<1x16x16xf32>
    %137 = vector.shape_cast %136 : vector<1x16x16xf32> to vector<16x16xf32>
    %138 = vector.broadcast %135 : f32 to vector<16x16xf32>
    %139 = arith.mulf %138, %137 : vector<16x16xf32>
    %140 = arith.addf %134, %139 : vector<16x16xf32>
    %c21 = arith.constant 21 : index
    %141 = memref.load %arg1[%c21] : memref<50xf32, #tpu.memory_space<smem>>
    %c0_80 = arith.constant 0 : index
    %c4_81 = arith.constant 4 : index
    %c1_82 = arith.constant 1 : index
    %142 = vector.load %arg4[%c0_80, %c4_81, %c1_82] : memref<2x20x20xf32, #tpu.memory_space<vmem>>, vector<1x16x16xf32>
    %143 = vector.shape_cast %142 : vector<1x16x16xf32> to vector<16x16xf32>
    %144 = vector.broadcast %141 : f32 to vector<16x16xf32>
    %145 = arith.mulf %144, %143 : vector<16x16xf32>
    %146 = arith.addf %140, %145 : vector<16x16xf32>
    %c22 = arith.constant 22 : index
    %147 = memref.load %arg1[%c22] : memref<50xf32, #tpu.memory_space<smem>>
    %c0_83 = arith.constant 0 : index
    %c4_84 = arith.constant 4 : index
    %c2_85 = arith.constant 2 : index
    %148 = vector.load %arg4[%c0_83, %c4_84, %c2_85] : memref<2x20x20xf32, #tpu.memory_space<vmem>>, vector<1x16x16xf32>
    %149 = vector.shape_cast %148 : vector<1x16x16xf32> to vector<16x16xf32>
    %150 = vector.broadcast %147 : f32 to vector<16x16xf32>
    %151 = arith.mulf %150, %149 : vector<16x16xf32>
    %152 = arith.addf %146, %151 : vector<16x16xf32>
    %c23 = arith.constant 23 : index
    %153 = memref.load %arg1[%c23] : memref<50xf32, #tpu.memory_space<smem>>
    %c0_86 = arith.constant 0 : index
    %c4_87 = arith.constant 4 : index
    %c3_88 = arith.constant 3 : index
    %154 = vector.load %arg4[%c0_86, %c4_87, %c3_88] : memref<2x20x20xf32, #tpu.memory_space<vmem>>, vector<1x16x16xf32>
    %155 = vector.shape_cast %154 : vector<1x16x16xf32> to vector<16x16xf32>
    %156 = vector.broadcast %153 : f32 to vector<16x16xf32>
    %157 = arith.mulf %156, %155 : vector<16x16xf32>
    %158 = arith.addf %152, %157 : vector<16x16xf32>
    %c24 = arith.constant 24 : index
    %159 = memref.load %arg1[%c24] : memref<50xf32, #tpu.memory_space<smem>>
    %c0_89 = arith.constant 0 : index
    %c4_90 = arith.constant 4 : index
    %c4_91 = arith.constant 4 : index
    %160 = vector.load %arg4[%c0_89, %c4_90, %c4_91] : memref<2x20x20xf32, #tpu.memory_space<vmem>>, vector<1x16x16xf32>
    %161 = vector.shape_cast %160 : vector<1x16x16xf32> to vector<16x16xf32>
    %162 = vector.broadcast %159 : f32 to vector<16x16xf32>
    %163 = arith.mulf %162, %161 : vector<16x16xf32>
    %164 = arith.addf %158, %163 : vector<16x16xf32>
    %c25 = arith.constant 25 : index
    %165 = memref.load %arg1[%c25] : memref<50xf32, #tpu.memory_space<smem>>
    %c1_92 = arith.constant 1 : index
    %c0_93 = arith.constant 0 : index
    %c0_94 = arith.constant 0 : index
    %166 = vector.load %arg4[%c1_92, %c0_93, %c0_94] : memref<2x20x20xf32, #tpu.memory_space<vmem>>, vector<1x16x16xf32>
    %167 = vector.shape_cast %166 : vector<1x16x16xf32> to vector<16x16xf32>
    %168 = vector.broadcast %165 : f32 to vector<16x16xf32>
    %169 = arith.mulf %168, %167 : vector<16x16xf32>
    %170 = arith.addf %164, %169 : vector<16x16xf32>
    %c26 = arith.constant 26 : index
    %171 = memref.load %arg1[%c26] : memref<50xf32, #tpu.memory_space<smem>>
    %c1_95 = arith.constant 1 : index
    %c0_96 = arith.constant 0 : index
    %c1_97 = arith.constant 1 : index
    %172 = vector.load %arg4[%c1_95, %c0_96, %c1_97] : memref<2x20x20xf32, #tpu.memory_space<vmem>>, vector<1x16x16xf32>
    %173 = vector.shape_cast %172 : vector<1x16x16xf32> to vector<16x16xf32>
    %174 = vector.broadcast %171 : f32 to vector<16x16xf32>
    %175 = arith.mulf %174, %173 : vector<16x16xf32>
    %176 = arith.addf %170, %175 : vector<16x16xf32>
    %c27 = arith.constant 27 : index
    %177 = memref.load %arg1[%c27] : memref<50xf32, #tpu.memory_space<smem>>
    %c1_98 = arith.constant 1 : index
    %c0_99 = arith.constant 0 : index
    %c2_100 = arith.constant 2 : index
    %178 = vector.load %arg4[%c1_98, %c0_99, %c2_100] : memref<2x20x20xf32, #tpu.memory_space<vmem>>, vector<1x16x16xf32>
    %179 = vector.shape_cast %178 : vector<1x16x16xf32> to vector<16x16xf32>
    %180 = vector.broadcast %177 : f32 to vector<16x16xf32>
    %181 = arith.mulf %180, %179 : vector<16x16xf32>
    %182 = arith.addf %176, %181 : vector<16x16xf32>
    %c28 = arith.constant 28 : index
    %183 = memref.load %arg1[%c28] : memref<50xf32, #tpu.memory_space<smem>>
    %c1_101 = arith.constant 1 : index
    %c0_102 = arith.constant 0 : index
    %c3_103 = arith.constant 3 : index
    %184 = vector.load %arg4[%c1_101, %c0_102, %c3_103] : memref<2x20x20xf32, #tpu.memory_space<vmem>>, vector<1x16x16xf32>
    %185 = vector.shape_cast %184 : vector<1x16x16xf32> to vector<16x16xf32>
    %186 = vector.broadcast %183 : f32 to vector<16x16xf32>
    %187 = arith.mulf %186, %185 : vector<16x16xf32>
    %188 = arith.addf %182, %187 : vector<16x16xf32>
    %c29 = arith.constant 29 : index
    %189 = memref.load %arg1[%c29] : memref<50xf32, #tpu.memory_space<smem>>
    %c1_104 = arith.constant 1 : index
    %c0_105 = arith.constant 0 : index
    %c4_106 = arith.constant 4 : index
    %190 = vector.load %arg4[%c1_104, %c0_105, %c4_106] : memref<2x20x20xf32, #tpu.memory_space<vmem>>, vector<1x16x16xf32>
    %191 = vector.shape_cast %190 : vector<1x16x16xf32> to vector<16x16xf32>
    %192 = vector.broadcast %189 : f32 to vector<16x16xf32>
    %193 = arith.mulf %192, %191 : vector<16x16xf32>
    %194 = arith.addf %188, %193 : vector<16x16xf32>
    %c30 = arith.constant 30 : index
    %195 = memref.load %arg1[%c30] : memref<50xf32, #tpu.memory_space<smem>>
    %c1_107 = arith.constant 1 : index
    %c1_108 = arith.constant 1 : index
    %c0_109 = arith.constant 0 : index
    %196 = vector.load %arg4[%c1_107, %c1_108, %c0_109] : memref<2x20x20xf32, #tpu.memory_space<vmem>>, vector<1x16x16xf32>
    %197 = vector.shape_cast %196 : vector<1x16x16xf32> to vector<16x16xf32>
    %198 = vector.broadcast %195 : f32 to vector<16x16xf32>
    %199 = arith.mulf %198, %197 : vector<16x16xf32>
    %200 = arith.addf %194, %199 : vector<16x16xf32>
    %c31 = arith.constant 31 : index
    %201 = memref.load %arg1[%c31] : memref<50xf32, #tpu.memory_space<smem>>
    %c1_110 = arith.constant 1 : index
    %c1_111 = arith.constant 1 : index
    %c1_112 = arith.constant 1 : index
    %202 = vector.load %arg4[%c1_110, %c1_111, %c1_112] : memref<2x20x20xf32, #tpu.memory_space<vmem>>, vector<1x16x16xf32>
    %203 = vector.shape_cast %202 : vector<1x16x16xf32> to vector<16x16xf32>
    %204 = vector.broadcast %201 : f32 to vector<16x16xf32>
    %205 = arith.mulf %204, %203 : vector<16x16xf32>
    %206 = arith.addf %200, %205 : vector<16x16xf32>
    %c32 = arith.constant 32 : index
    %207 = memref.load %arg1[%c32] : memref<50xf32, #tpu.memory_space<smem>>
    %c1_113 = arith.constant 1 : index
    %c1_114 = arith.constant 1 : index
    %c2_115 = arith.constant 2 : index
    %208 = vector.load %arg4[%c1_113, %c1_114, %c2_115] : memref<2x20x20xf32, #tpu.memory_space<vmem>>, vector<1x16x16xf32>
    %209 = vector.shape_cast %208 : vector<1x16x16xf32> to vector<16x16xf32>
    %210 = vector.broadcast %207 : f32 to vector<16x16xf32>
    %211 = arith.mulf %210, %209 : vector<16x16xf32>
    %212 = arith.addf %206, %211 : vector<16x16xf32>
    %c33 = arith.constant 33 : index
    %213 = memref.load %arg1[%c33] : memref<50xf32, #tpu.memory_space<smem>>
    %c1_116 = arith.constant 1 : index
    %c1_117 = arith.constant 1 : index
    %c3_118 = arith.constant 3 : index
    %214 = vector.load %arg4[%c1_116, %c1_117, %c3_118] : memref<2x20x20xf32, #tpu.memory_space<vmem>>, vector<1x16x16xf32>
    %215 = vector.shape_cast %214 : vector<1x16x16xf32> to vector<16x16xf32>
    %216 = vector.broadcast %213 : f32 to vector<16x16xf32>
    %217 = arith.mulf %216, %215 : vector<16x16xf32>
    %218 = arith.addf %212, %217 : vector<16x16xf32>
    %c34 = arith.constant 34 : index
    %219 = memref.load %arg1[%c34] : memref<50xf32, #tpu.memory_space<smem>>
    %c1_119 = arith.constant 1 : index
    %c1_120 = arith.constant 1 : index
    %c4_121 = arith.constant 4 : index
    %220 = vector.load %arg4[%c1_119, %c1_120, %c4_121] : memref<2x20x20xf32, #tpu.memory_space<vmem>>, vector<1x16x16xf32>
    %221 = vector.shape_cast %220 : vector<1x16x16xf32> to vector<16x16xf32>
    %222 = vector.broadcast %219 : f32 to vector<16x16xf32>
    %223 = arith.mulf %222, %221 : vector<16x16xf32>
    %224 = arith.addf %218, %223 : vector<16x16xf32>
    %c35 = arith.constant 35 : index
    %225 = memref.load %arg1[%c35] : memref<50xf32, #tpu.memory_space<smem>>
    %c1_122 = arith.constant 1 : index
    %c2_123 = arith.constant 2 : index
    %c0_124 = arith.constant 0 : index
    %226 = vector.load %arg4[%c1_122, %c2_123, %c0_124] : memref<2x20x20xf32, #tpu.memory_space<vmem>>, vector<1x16x16xf32>
    %227 = vector.shape_cast %226 : vector<1x16x16xf32> to vector<16x16xf32>
    %228 = vector.broadcast %225 : f32 to vector<16x16xf32>
    %229 = arith.mulf %228, %227 : vector<16x16xf32>
    %230 = arith.addf %224, %229 : vector<16x16xf32>
    %c36 = arith.constant 36 : index
    %231 = memref.load %arg1[%c36] : memref<50xf32, #tpu.memory_space<smem>>
    %c1_125 = arith.constant 1 : index
    %c2_126 = arith.constant 2 : index
    %c1_127 = arith.constant 1 : index
    %232 = vector.load %arg4[%c1_125, %c2_126, %c1_127] : memref<2x20x20xf32, #tpu.memory_space<vmem>>, vector<1x16x16xf32>
    %233 = vector.shape_cast %232 : vector<1x16x16xf32> to vector<16x16xf32>
    %234 = vector.broadcast %231 : f32 to vector<16x16xf32>
    %235 = arith.mulf %234, %233 : vector<16x16xf32>
    %236 = arith.addf %230, %235 : vector<16x16xf32>
    %c37 = arith.constant 37 : index
    %237 = memref.load %arg1[%c37] : memref<50xf32, #tpu.memory_space<smem>>
    %c1_128 = arith.constant 1 : index
    %c2_129 = arith.constant 2 : index
    %c2_130 = arith.constant 2 : index
    %238 = vector.load %arg4[%c1_128, %c2_129, %c2_130] : memref<2x20x20xf32, #tpu.memory_space<vmem>>, vector<1x16x16xf32>
    %239 = vector.shape_cast %238 : vector<1x16x16xf32> to vector<16x16xf32>
    %240 = vector.broadcast %237 : f32 to vector<16x16xf32>
    %241 = arith.mulf %240, %239 : vector<16x16xf32>
    %242 = arith.addf %236, %241 : vector<16x16xf32>
    %c38 = arith.constant 38 : index
    %243 = memref.load %arg1[%c38] : memref<50xf32, #tpu.memory_space<smem>>
    %c1_131 = arith.constant 1 : index
    %c2_132 = arith.constant 2 : index
    %c3_133 = arith.constant 3 : index
    %244 = vector.load %arg4[%c1_131, %c2_132, %c3_133] : memref<2x20x20xf32, #tpu.memory_space<vmem>>, vector<1x16x16xf32>
    %245 = vector.shape_cast %244 : vector<1x16x16xf32> to vector<16x16xf32>
    %246 = vector.broadcast %243 : f32 to vector<16x16xf32>
    %247 = arith.mulf %246, %245 : vector<16x16xf32>
    %248 = arith.addf %242, %247 : vector<16x16xf32>
    %c39 = arith.constant 39 : index
    %249 = memref.load %arg1[%c39] : memref<50xf32, #tpu.memory_space<smem>>
    %c1_134 = arith.constant 1 : index
    %c2_135 = arith.constant 2 : index
    %c4_136 = arith.constant 4 : index
    %250 = vector.load %arg4[%c1_134, %c2_135, %c4_136] : memref<2x20x20xf32, #tpu.memory_space<vmem>>, vector<1x16x16xf32>
    %251 = vector.shape_cast %250 : vector<1x16x16xf32> to vector<16x16xf32>
    %252 = vector.broadcast %249 : f32 to vector<16x16xf32>
    %253 = arith.mulf %252, %251 : vector<16x16xf32>
    %254 = arith.addf %248, %253 : vector<16x16xf32>
    %c40 = arith.constant 40 : index
    %255 = memref.load %arg1[%c40] : memref<50xf32, #tpu.memory_space<smem>>
    %c1_137 = arith.constant 1 : index
    %c3_138 = arith.constant 3 : index
    %c0_139 = arith.constant 0 : index
    %256 = vector.load %arg4[%c1_137, %c3_138, %c0_139] : memref<2x20x20xf32, #tpu.memory_space<vmem>>, vector<1x16x16xf32>
    %257 = vector.shape_cast %256 : vector<1x16x16xf32> to vector<16x16xf32>
    %258 = vector.broadcast %255 : f32 to vector<16x16xf32>
    %259 = arith.mulf %258, %257 : vector<16x16xf32>
    %260 = arith.addf %254, %259 : vector<16x16xf32>
    %c41 = arith.constant 41 : index
    %261 = memref.load %arg1[%c41] : memref<50xf32, #tpu.memory_space<smem>>
    %c1_140 = arith.constant 1 : index
    %c3_141 = arith.constant 3 : index
    %c1_142 = arith.constant 1 : index
    %262 = vector.load %arg4[%c1_140, %c3_141, %c1_142] : memref<2x20x20xf32, #tpu.memory_space<vmem>>, vector<1x16x16xf32>
    %263 = vector.shape_cast %262 : vector<1x16x16xf32> to vector<16x16xf32>
    %264 = vector.broadcast %261 : f32 to vector<16x16xf32>
    %265 = arith.mulf %264, %263 : vector<16x16xf32>
    %266 = arith.addf %260, %265 : vector<16x16xf32>
    %c42 = arith.constant 42 : index
    %267 = memref.load %arg1[%c42] : memref<50xf32, #tpu.memory_space<smem>>
    %c1_143 = arith.constant 1 : index
    %c3_144 = arith.constant 3 : index
    %c2_145 = arith.constant 2 : index
    %268 = vector.load %arg4[%c1_143, %c3_144, %c2_145] : memref<2x20x20xf32, #tpu.memory_space<vmem>>, vector<1x16x16xf32>
    %269 = vector.shape_cast %268 : vector<1x16x16xf32> to vector<16x16xf32>
    %270 = vector.broadcast %267 : f32 to vector<16x16xf32>
    %271 = arith.mulf %270, %269 : vector<16x16xf32>
    %272 = arith.addf %266, %271 : vector<16x16xf32>
    %c43 = arith.constant 43 : index
    %273 = memref.load %arg1[%c43] : memref<50xf32, #tpu.memory_space<smem>>
    %c1_146 = arith.constant 1 : index
    %c3_147 = arith.constant 3 : index
    %c3_148 = arith.constant 3 : index
    %274 = vector.load %arg4[%c1_146, %c3_147, %c3_148] : memref<2x20x20xf32, #tpu.memory_space<vmem>>, vector<1x16x16xf32>
    %275 = vector.shape_cast %274 : vector<1x16x16xf32> to vector<16x16xf32>
    %276 = vector.broadcast %273 : f32 to vector<16x16xf32>
    %277 = arith.mulf %276, %275 : vector<16x16xf32>
    %278 = arith.addf %272, %277 : vector<16x16xf32>
    %c44 = arith.constant 44 : index
    %279 = memref.load %arg1[%c44] : memref<50xf32, #tpu.memory_space<smem>>
    %c1_149 = arith.constant 1 : index
    %c3_150 = arith.constant 3 : index
    %c4_151 = arith.constant 4 : index
    %280 = vector.load %arg4[%c1_149, %c3_150, %c4_151] : memref<2x20x20xf32, #tpu.memory_space<vmem>>, vector<1x16x16xf32>
    %281 = vector.shape_cast %280 : vector<1x16x16xf32> to vector<16x16xf32>
    %282 = vector.broadcast %279 : f32 to vector<16x16xf32>
    %283 = arith.mulf %282, %281 : vector<16x16xf32>
    %284 = arith.addf %278, %283 : vector<16x16xf32>
    %c45 = arith.constant 45 : index
    %285 = memref.load %arg1[%c45] : memref<50xf32, #tpu.memory_space<smem>>
    %c1_152 = arith.constant 1 : index
    %c4_153 = arith.constant 4 : index
    %c0_154 = arith.constant 0 : index
    %286 = vector.load %arg4[%c1_152, %c4_153, %c0_154] : memref<2x20x20xf32, #tpu.memory_space<vmem>>, vector<1x16x16xf32>
    %287 = vector.shape_cast %286 : vector<1x16x16xf32> to vector<16x16xf32>
    %288 = vector.broadcast %285 : f32 to vector<16x16xf32>
    %289 = arith.mulf %288, %287 : vector<16x16xf32>
    %290 = arith.addf %284, %289 : vector<16x16xf32>
    %c46 = arith.constant 46 : index
    %291 = memref.load %arg1[%c46] : memref<50xf32, #tpu.memory_space<smem>>
    %c1_155 = arith.constant 1 : index
    %c4_156 = arith.constant 4 : index
    %c1_157 = arith.constant 1 : index
    %292 = vector.load %arg4[%c1_155, %c4_156, %c1_157] : memref<2x20x20xf32, #tpu.memory_space<vmem>>, vector<1x16x16xf32>
    %293 = vector.shape_cast %292 : vector<1x16x16xf32> to vector<16x16xf32>
    %294 = vector.broadcast %291 : f32 to vector<16x16xf32>
    %295 = arith.mulf %294, %293 : vector<16x16xf32>
    %296 = arith.addf %290, %295 : vector<16x16xf32>
    %c47 = arith.constant 47 : index
    %297 = memref.load %arg1[%c47] : memref<50xf32, #tpu.memory_space<smem>>
    %c1_158 = arith.constant 1 : index
    %c4_159 = arith.constant 4 : index
    %c2_160 = arith.constant 2 : index
    %298 = vector.load %arg4[%c1_158, %c4_159, %c2_160] : memref<2x20x20xf32, #tpu.memory_space<vmem>>, vector<1x16x16xf32>
    %299 = vector.shape_cast %298 : vector<1x16x16xf32> to vector<16x16xf32>
    %300 = vector.broadcast %297 : f32 to vector<16x16xf32>
    %301 = arith.mulf %300, %299 : vector<16x16xf32>
    %302 = arith.addf %296, %301 : vector<16x16xf32>
    %c48 = arith.constant 48 : index
    %303 = memref.load %arg1[%c48] : memref<50xf32, #tpu.memory_space<smem>>
    %c1_161 = arith.constant 1 : index
    %c4_162 = arith.constant 4 : index
    %c3_163 = arith.constant 3 : index
    %304 = vector.load %arg4[%c1_161, %c4_162, %c3_163] : memref<2x20x20xf32, #tpu.memory_space<vmem>>, vector<1x16x16xf32>
    %305 = vector.shape_cast %304 : vector<1x16x16xf32> to vector<16x16xf32>
    %306 = vector.broadcast %303 : f32 to vector<16x16xf32>
    %307 = arith.mulf %306, %305 : vector<16x16xf32>
    %308 = arith.addf %302, %307 : vector<16x16xf32>
    %c49 = arith.constant 49 : index
    %309 = memref.load %arg1[%c49] : memref<50xf32, #tpu.memory_space<smem>>
    %c1_164 = arith.constant 1 : index
    %c4_165 = arith.constant 4 : index
    %c4_166 = arith.constant 4 : index
    %310 = vector.load %arg4[%c1_164, %c4_165, %c4_166] : memref<2x20x20xf32, #tpu.memory_space<vmem>>, vector<1x16x16xf32>
    %311 = vector.shape_cast %310 : vector<1x16x16xf32> to vector<16x16xf32>
    %312 = vector.broadcast %309 : f32 to vector<16x16xf32>
    %313 = arith.mulf %312, %311 : vector<16x16xf32>
    %314 = arith.addf %308, %313 : vector<16x16xf32>
    %cst_167 = arith.constant 0.000000e+00 : f32
    %315 = vector.broadcast %cst_167 : f32 to vector<16x16xf32>
    %316 = arith.maximumf %314, %315 : vector<16x16xf32>
    %317 = arith.negf %316 : vector<16x16xf32>
    %318 = math.exp %317 : vector<16x16xf32>
    %cst_168 = arith.constant 1.000000e+00 : f32
    %319 = vector.broadcast %cst_168 : f32 to vector<16x16xf32>
    %320 = arith.addf %319, %318 : vector<16x16xf32>
    %321 = arith.divf %319, %320 : vector<16x16xf32>
    %322 = vector.shape_cast %321 : vector<16x16xf32> to vector<1x16x16xf32>
    %323 = vector.broadcast %322 : vector<1x16x16xf32> to vector<4x16x16xf32>
    %324 = arith.mulf %1, %323 : vector<4x16x16xf32>
    %c0_169 = arith.constant 0 : index
    %c0_170 = arith.constant 0 : index
    %c0_171 = arith.constant 0 : index
    %c0_172 = arith.constant 0 : index
    %325 = vector.load %arg3[%c0_169, %c0_170, %c0_171, %c0_172] : memref<1x4x16x16xf32, #tpu.memory_space<vmem>>, vector<1x4x16x16xf32>
    %326 = vector.shape_cast %325 : vector<1x4x16x16xf32> to vector<4x16x16xf32>
    %327 = vector.shape_cast %324 : vector<4x16x16xf32> to vector<1x4x16x16xf32>
    tpu.vector_store %arg3[%c0_169, %c0_170, %c0_171, %c0_172], %327 {strides = array<i32>} : memref<1x4x16x16xf32, #tpu.memory_space<vmem>>, vector<1x4x16x16xf32>,
    return
  }
  func.func @transform_0(%arg0: i32) -> i32 {
    %c0_i32 = arith.constant 0 : i32
    %c0_i32_0 = arith.constant 0 : i32
    return %c0_i32 : i32
  }
  func.func @transform_1(%arg0: i32) -> (i32, i32, i32, i32) {
    %c0_i32 = arith.constant 0 : i32
    %c0_i32_0 = arith.constant 0 : i32
    %c0_i32_1 = arith.constant 0 : i32
    %c0_i32_2 = arith.constant 0 : i32
    return %arg0, %c0_i32, %c0_i32_0, %c0_i32_1 : i32, i32, i32, i32
  }
  func.func @transform_2(%arg0: i32) -> (i32, i32, i32, i32) {
    %c0_i32 = arith.constant 0 : i32
    %c0_i32_0 = arith.constant 0 : i32
    %c0_i32_1 = arith.constant 0 : i32
    %c0_i32_2 = arith.constant 0 : i32
    return %arg0, %c0_i32, %c0_i32_0, %c0_i32_1 : i32, i32, i32, i32
  }
}

module attributes {stable_mosaic.version = 11 : i64} {
  func.func @sab_pool_kernel(%arg0: i32, %arg1: i32, %arg2: memref<1x4x256xf32, #tpu.memory_space<vmem>>, %arg3: memref<1x2x256xf32, #tpu.memory_space<vmem>>) attributes {dimension_semantics = [#tpu.dimension_semantics<parallel>, #tpu.dimension_semantics<parallel>], iteration_bounds = array<i64: 2, 1>, scalar_prefetch = 0 : i64, scratch_operands = 0 : i64, tpu.core_type = #tpu.core_type<tc>, window_params = [{transform_indices = @transform_0, window_bounds = array<i64: 1, 4, 256>}, {transform_indices = @transform_1, window_bounds = array<i64: 1, 2, 256>}]} {
    %c0 = arith.constant 0 : index
    %c0_0 = arith.constant 0 : index
    %c0_1 = arith.constant 0 : index
    %0 = vector.load %arg2[%c0, %c0_0, %c0_1] : memref<1x4x256xf32, #tpu.memory_space<vmem>>, vector<1x4x256xf32>
    %1 = vector.shape_cast %0 : vector<1x4x256xf32> to vector<4x256xf32>
    %cst = arith.constant dense<0xFF800000> : vector<256xf32>
    %2 = vector.multi_reduction <maximumf>, %1, %cst [0] : vector<4x256xf32> to vector<256xf32>
    %3 = vector.shape_cast %2 : vector<256xf32> to vector<1x256xf32>
    %c0_2 = arith.constant 0 : index
    %c0_3 = arith.constant 0 : index
    %c0_4 = arith.constant 0 : index
    %4 = vector.load %arg3[%c0_2, %c0_3, %c0_4] : memref<1x2x256xf32, #tpu.memory_space<vmem>>, vector<1x1x256xf32>
    %5 = vector.shape_cast %4 : vector<1x1x256xf32> to vector<1x256xf32>
    %6 = vector.shape_cast %3 : vector<1x256xf32> to vector<1x1x256xf32>
    tpu.vector_store %arg3[%c0_2, %c0_3, %c0_4], %6 {strides = array<i32>} : memref<1x2x256xf32, #tpu.memory_space<vmem>>, vector<1x1x256xf32>,
    %cst_5 = arith.constant dense<0.000000e+00> : vector<256xf32>
    %7 = vector.multi_reduction <add>, %1, %cst_5 [0] : vector<4x256xf32> to vector<256xf32>
    %8 = vector.shape_cast %7 : vector<256xf32> to vector<1x256xf32>
    %cst_6 = arith.constant 4.000000e+00 : f32
    %9 = vector.broadcast %cst_6 : f32 to vector<1x256xf32>
    %10 = arith.divf %8, %9 : vector<1x256xf32>
    %c0_7 = arith.constant 0 : index
    %c1 = arith.constant 1 : index
    %c0_8 = arith.constant 0 : index
    %11 = vector.load %arg3[%c0_7, %c1, %c0_8] : memref<1x2x256xf32, #tpu.memory_space<vmem>>, vector<1x1x256xf32>
    %12 = vector.shape_cast %11 : vector<1x1x256xf32> to vector<1x256xf32>
    %13 = vector.shape_cast %10 : vector<1x256xf32> to vector<1x1x256xf32>
    tpu.vector_store %arg3[%c0_7, %c1, %c0_8], %13 {strides = array<i32>} : memref<1x2x256xf32, #tpu.memory_space<vmem>>, vector<1x1x256xf32>,
    return
  }
  func.func @transform_0(%arg0: i32, %arg1: i32) -> (i32, i32, i32) {
    %c0_i32 = arith.constant 0 : i32
    %c0_i32_0 = arith.constant 0 : i32
    return %arg0, %c0_i32, %arg1 : i32, i32, i32
  }
  func.func @transform_1(%arg0: i32, %arg1: i32) -> (i32, i32, i32) {
    %c0_i32 = arith.constant 0 : i32
    %c0_i32_0 = arith.constant 0 : i32
    return %arg0, %c0_i32, %arg1 : i32, i32, i32
  }
}

</mosaic_0001>

<llo_original>
// kernel: tpu_custom_call.1
$region0: #{tpu_custom_call.1}
  #allocation0 [shape = 'u32[]', space=smem, size = 0x4, offset = 0x4, fixed_abs, tag = 'smem constant byte address 0x4 - core index']
  #allocation1 [shape = 'u32[144,128]{1,0:T(1,128)}', space=vmem, size = 0x12000, scoped, tag = 'internal scratch']
  #allocation2 [shape = 'f32[2,20,20]{2,1,0:T(8,128)}', space=vmem, size = 0x6000, scoped, tag = 'scratch operand']
  %s0 = inlined_call_operand.hbm [shape: f32[50], index: 0, kind: input, shape index: {}]
  %s1 = inlined_call_operand.hbm [shape: f32[2,4,16,16], index: 1, kind: input, shape index: {}]
  %s2 = inlined_call_operand.hbm [shape: f32[2,4,16,16], index: 2, kind: output, shape index: {}]
  %s3 = sld [smem:[#allocation0]]
  $region49: #{tpu_custom_call.1} parent=0
    _
  %s5 = ssub.s32 1, %s3
  %s6 = scalar_select 0, %s5, %s3
  $region1: #{tpu_custom_call.1} parent=0
    #allocation3 [shape = 'u8[512]{0}', space=smem, size = 0x200, scoped, tag = 'input window, operand 0, single buffered']
    #allocation4 [shape = 's32[2]{0}', space=sflag, size = 0x8, scoped, tag = 'scoped memory for tpu_custom_call.1']
    #allocation5 [shape = 's32[2]{0}', space=sflag, size = 0x8, scoped, tag = 'scoped memory for tpu_custom_call.1']
    #allocation6 [shape = 's32[2]{0}', space=sflag, size = 0x8, scoped, tag = 'scoped memory for tpu_custom_call.1']
    #allocation7 [shape = 'u8[65536]{0}', space=vmem, size = 0x10000, scoped, tag = 'input window, operand 1']
    #allocation8 [shape = 'u8[65536]{0}', space=vmem, size = 0x10000, scoped, tag = 'output window, operand 0']
    %7 = vsyncpa [#allocation6], 0
    %8 = vsyncpa [#allocation4], 0
    %s9 = scalar_lea.sflag [#allocation4], 1
    %10 = vsyncpa %s9, 0
    %11 = vsyncpa [#allocation5], 0
    %s12 = scalar_lea.sflag [#allocation5], 1
    %13 = vsyncpa %s12, 0
    loop: start=0, step=1, limit=4
    $region2: #{tpu_custom_call.1} parent=1 // loop_pre_header
      _
    $region3: #{tpu_custom_call.1} parent=1 // loop_header
      %s15 = sphi 0, %s19
      %p16 = scmp.ge.s32.totalorder %s15, 4
      %s23 = sphi 0, %s23
      %s25 = sphi 0, %s23
      %s26 = sphi 0, %s25
      %s40 = sphi 0, %s26
      %s46 = sphi 0, %s48
      %s49 = sphi 0, %s46
      %s50 = sphi 0, %s49
      %s66 = sphi 0, %s50
      %s72 = sphi 0, %s74
      %s75 = sphi 0, %s72
      %s76 = sphi 0, %s75
      %s92 = sphi 0, %s76
    $region4: #{tpu_custom_call.1} parent=1 // loop_header_branch
      %18 = sbr.rel (%p16) target = $region8
    $region5: #{tpu_custom_call.1} parent=1 // loop_body
      %s20 = ssub.s32 %s15, 1
      %s21 = ssub.s32 %s15, 2
      %s22 = sadd.s32 %s15, 1
      %s24 = sadd.s32 %s23, 1
      %p27 = scmp.eq.s32.totalorder %s15, 1
      %p28 = scmp.ne.s32.totalorder %s23, %s25
      %p29 = scmp.eq.s32.totalorder %s15, 0
      %p30 = por %p28, %p29
      %p31 = scmp.ne.s32.totalorder %s23, %s25
      %p32 = scmp.eq.s32.totalorder %s20, 1
      %p33 = por %p31, %p32
      %p34 = scmp.ne.s32.totalorder %s25, %s26
      %p35 = scmp.eq.s32.totalorder %s20, 0
      %p36 = por %p34, %p35
      %p37 = scmp.ne.s32.totalorder %s25, %s26
      %p38 = scmp.eq.s32.totalorder %s21, 1
      %p39 = por %p37, %p38
      %p41 = scmp.ne.s32.totalorder %s26, %s40
      %p42 = scmp.eq.s32.totalorder %s21, 0
      %p43 = por %p41, %p42
      %s44 = ssub.s32 %s15, %s22
      %p45 = scmp.eq.s32.totalorder %s44, 0
      %s47 = sadd.s32 %s46, 1
      %s48 = scalar_select %p45, %s46, %s47
      %p51 = pneg %p45
      %p52 = scmp.eq.s32.totalorder %s15, 1
      %p53 = por %p51, %p52
      %p54 = scmp.ne.s32.totalorder %s46, %s49
      %p55 = scmp.eq.s32.totalorder %s15, 0
      %p56 = por %p54, %p55
      %p57 = scmp.ne.s32.totalorder %s46, %s49
      %p58 = scmp.eq.s32.totalorder %s20, 1
      %p59 = por %p57, %p58
      %p60 = scmp.ne.s32.totalorder %s49, %s50
      %p61 = scmp.eq.s32.totalorder %s20, 0
      %p62 = por %p60, %p61
      %p63 = scmp.ne.s32.totalorder %s49, %s50
      %p64 = scmp.eq.s32.totalorder %s21, 1
      %p65 = por %p63, %p64
      %p67 = scmp.ne.s32.totalorder %s50, %s66
      %p68 = scmp.eq.s32.totalorder %s21, 0
      %p69 = por %p67, %p68
      %s70 = ssub.s32 %s15, %s22
      %p71 = scmp.eq.s32.totalorder %s70, 0
      %s73 = sadd.s32 %s72, 1
      %s74 = scalar_select %p71, %s72, %s73
      %p77 = pneg %p71
      %p78 = scmp.eq.s32.totalorder %s15, 1
      %p79 = por %p77, %p78
      %p80 = scmp.ne.s32.totalorder %s72, %s75
      %p81 = scmp.eq.s32.totalorder %s15, 0
      %p82 = por %p80, %p81
      %p83 = scmp.ne.s32.totalorder %s72, %s75
      %p84 = scmp.eq.s32.totalorder %s20, 1
      %p85 = por %p83, %p84
      %p86 = scmp.ne.s32.totalorder %s75, %s76
      %p87 = scmp.eq.s32.totalorder %s20, 0
      %p88 = por %p86, %p87
      %p89 = scmp.ne.s32.totalorder %s75, %s76
      %p90 = scmp.eq.s32.totalorder %s21, 1
      %p91 = por %p89, %p90
      %p93 = scmp.ne.s32.totalorder %s76, %s92
      %p94 = scmp.eq.s32.totalorder %s21, 0
      %p95 = por %p93, %p94
      %p96 = scmp.le.s32.totalorder 1, %s15
      %p97 = scmp.lt.s32.totalorder %s15, 3
      %p98 = pnand %p96, %p97
      %p99 = pneg %p98
      // Predicated region
      $region9: #{tpu_custom_call.1} parent=5 // pred_check
        _
      $region10: #{tpu_custom_call.1} parent=5 // pred_check_branch
        %101 = sbr.rel (%p98) target = $region12
      $region11: #{tpu_custom_call.1} parent=5 // pred_region
        %s102 = ssub.s32 %s15, 1
        // Predicated region
        $region13: #{tpu_custom_call.1} parent=11 // pred_check
          %p103 = pneg %p36
        $region14: #{tpu_custom_call.1} parent=11 // pred_check_branch
          %105 = sbr.rel (%p103) target = $region16
        $region15: #{tpu_custom_call.1} parent=11 // pred_region
          %s107 = ssub.s32 16, 16
          %108 = vsyncadd [#allocation6], %s107
          %111 = dma.hbm_to_smem %s0, 16, [#allocation3], [#allocation6]
        $region16: #{tpu_custom_call.1} parent=11 // pred_fallthru
          _
      $region12: #{tpu_custom_call.1} parent=5 // pred_fallthru
        _
      %p112 = scmp.lt.s32.totalorder %s15, 2
      // Predicated region
      $region17: #{tpu_custom_call.1} parent=5 // pred_check
        %p113 = pneg %p112
      $region18: #{tpu_custom_call.1} parent=5 // pred_check_branch
        %115 = sbr.rel (%p113) target = $region20
      $region19: #{tpu_custom_call.1} parent=5 // pred_region
        // Predicated region
        $region21: #{tpu_custom_call.1} parent=19 // pred_check
          %p116 = pneg %p56
        $region22: #{tpu_custom_call.1} parent=19 // pred_check_branch
          %118 = sbr.rel (%p116) target = $region24
        $region23: #{tpu_custom_call.1} parent=19 // pred_region
          %s119 = sand.u32 %s46, 1
          %s120 = scalar_lea.sflag [#allocation4], %s119
          %s121 = sand.u32 %s46, 1
          %s122 = smul.addr %s121, 64
          %s123 = scalar_lea.vmem [#allocation7], %s122
          %s125 = ssub.s32 1024, 1024
          %126 = vsyncadd %s120, %s125
          %s127 = smul.addr %s15, 8
          %s128 = smul.addr %s127, 128
          %s129 = scalar_lea.hbm %s1, %s128
          %s130 = sshll.u32 %s123, 4
          %s131 = int_to_ptr.vmem [resolvable:$true] %s130
          %136 = dma.hbm_to_vmem [thread:$0]  %s129, 1024, %s131, %s120, 128, 128, 8
        $region24: #{tpu_custom_call.1} parent=19 // pred_fallthru
          _
      $region20: #{tpu_custom_call.1} parent=5 // pred_fallthru
        _
      %p137 = scmp.le.s32.totalorder 1, %s15
      %p138 = scmp.lt.s32.totalorder %s15, 3
      %p139 = pnand %p137, %p138
      %p140 = pneg %p139
      // Predicated region
      $region25: #{tpu_custom_call.1} parent=5 // pred_check
        _
      $region26: #{tpu_custom_call.1} parent=5 // pred_check_branch
        %142 = sbr.rel (%p139) target = $region28
      $region27: #{tpu_custom_call.1} parent=5 // pred_region
        %s143 = ssub.s32 %s15, 1
        // Predicated region
        $region29: #{tpu_custom_call.1} parent=27 // pred_check
          %p144 = pneg %p36
        $region30: #{tpu_custom_call.1} parent=27 // pred_check_branch
          %146 = sbr.rel (%p144) target = $region32
        $region31: #{tpu_custom_call.1} parent=27 // pred_region
          %147 = dma.done [#allocation6], 16
        $region32: #{tpu_custom_call.1} parent=27 // pred_fallthru
          _
        %s148 = sand.u32 %s49, 1
        %s149 = scalar_lea.sflag [#allocation4], %s148
        %s150 = sand.u32 %s49, 1
        %s151 = smul.addr %s150, 64
        %s152 = scalar_lea.vmem [#allocation7], %s151
        // Predicated region
        $region33: #{tpu_custom_call.1} parent=27 // pred_check
          %p153 = pneg %p62
        $region34: #{tpu_custom_call.1} parent=27 // pred_check_branch
          %155 = sbr.rel (%p153) target = $region36
        $region35: #{tpu_custom_call.1} parent=27 // pred_region
          %156 = dma.done %s149, 1024
        $region36: #{tpu_custom_call.1} parent=27 // pred_fallthru
          _
        %157 = sfence
        %p158 = pneg %p36
        %p159 = pneg %p33
        %s160 = sand.u32 %s49, 1
        %s161 = scalar_lea.sflag [#allocation4], %s160
        %s162 = sand.u32 %s49, 1
        %s163 = smul.addr %s162, 64
        %s164 = scalar_lea.vmem [#allocation7], %s163
        %p165 = pneg %p62
        %p166 = pneg %p59
        %p167 = pneg %p88
        %p168 = pneg %p85
        %s169 = sand.u32 %s75, 1
        %s170 = scalar_lea.sflag [#allocation5], %s169
        %s171 = sand.u32 %s75, 1
        %s172 = smul.addr %s171, 64
        %s173 = scalar_lea.vmem [#allocation8], %s172
        %v174 = vld [vmem:[%s152] sm:$0xff]
        %v175 = vld [vmem:[%s152 + $0x8] sm:$0xff]
        %v176 = vld [vmem:[%s152 + $0x10] sm:$0xff]
        %v177 = vld [vmem:[%s152 + $0x18] sm:$0xff]
        %v178 = vld [vmem:[%s152 + $0x20] sm:$0xff]
        %v179 = vld [vmem:[%s152 + $0x28] sm:$0xff]
        %v180 = vld [vmem:[%s152 + $0x30] sm:$0xff]
        %v181 = vld [vmem:[%s152 + $0x38] sm:$0xff]
        %vm182 = vcmask 130048
        %v183 = vsel %vm182, %v174, -inf
        %v184 = vsel %vm182, %v176, -inf
        %v185 = vsel %vm182, %v178, -inf
        %v186 = vmax.f32 %v183, %v185
        %v187 = vsel %vm182, %v180, -inf
        %v188 = vmax.f32 %v184, %v187
        %v189 = vmax.f32 %v186, %v188
        %v190 = vsel %vm182, %v175, -inf
        %v191 = vsel %vm182, %v177, -inf
        %v192 = vsel %vm182, %v179, -inf
        %v193 = vmax.f32 %v190, %v192
        %v194 = vsel %vm182, %v181, -inf
        %v195 = vmax.f32 %v191, %v194
        %v196 = vmax.f32 %v193, %v195
        %v197 = vsel %vm182, %v174, 0.0
        %v198 = vsel %vm182, %v176, 0.0
        %v199 = vadd.f32 %v197, %v198
        %v200 = vsel %vm182, %v178, 0.0
        %v201 = vadd.f32 %v199, %v200
        %v202 = vsel %vm182, %v180, 0.0
        %v203 = vadd.f32 %v201, %v202
        %v204 = vsel %vm182, %v175, 0.0
        %v205 = vsel %vm182, %v177, 0.0
        %v206 = vadd.f32 %v204, %v205
        %v207 = vsel %vm182, %v179, 0.0
        %v208 = vadd.f32 %v206, %v207
        %v209 = vsel %vm182, %v181, 0.0
        %v210 = vadd.f32 %v208, %v209
        %v211 = vrcp.pop 4.0
        %v212 = vmul.f32 %v203, %v211
        %v213 = vmul.f32 %v210, %v211
        %vm214 = vcmask 162816
        %215 = vst.msk [vmem:[#allocation2] sm:$0xff] %vm214, 0.0
        %216 = vst.msk [vmem:[#allocation2 + $0x8] sm:$0xff] %vm214, 0.0
        %vm217 = vcmask 158720
        %218 = vst.msk [vmem:[#allocation2 + $0x10] sm:$0xf] %vm217, 0.0
        %219 = vst.msk [vmem:[#allocation2 + $0x18] sm:$0xff] %vm214, 0.0
        %220 = vst.msk [vmem:[#allocation2 + $0x20] sm:$0xff] %vm214, 0.0
        %221 = vst.msk [vmem:[#allocation2 + $0x28] sm:$0xf] %vm217, 0.0
        %224 = vrot.lane.b32.xlu0 %v189, 2
        %v225 = vpop.permute.xlu0 %224
        %226 = vrot.lane.b32.xlu0 %v196, 2
        %v227 = vpop.permute.xlu0 %226
        %vm230 = vcmask 146448
        %231 = vst.msk [vmem:[#allocation2 + $0x2] sm:$0xff] %vm230, %v225
        %232 = vst.msk [vmem:[#allocation2 + $0xa] sm:$0xff] %vm230, %v227
        %235 = vrot.lane.b32.xlu0 %v212, 2
        %v236 = vpop.permute.xlu0 %235
        %237 = vrot.lane.b32.xlu0 %v213, 2
        %v238 = vpop.permute.xlu0 %237
        %s241 = scalar_lea.vmem [#allocation2], 24
        %242 = vst.msk [vmem:[%s241 + $0x2] sm:$0xff] %vm230, %v236
        %243 = vst.msk [vmem:[%s241 + $0xa] sm:$0xff] %vm230, %v238
        %s244 = sld [smem:[#allocation3]]
        %v245 = vld [vmem:[#allocation2] sm:$0xff]
        %v246 = vld [vmem:[#allocation2 + $0x8] sm:$0xff]
        %v247 = vstv %s244
        %v248 = vmul.f32 %v247, %v245
        %v249 = vmul.f32 %v247, %v246
        %v250 = vadd.f32 %v248, 0.0
        %v251 = vadd.f32 %v249, 0.0
        %s252 = sld [smem:[#allocation3 + $0x1]]
        %v253 = vstv %s252
        %v254 = vmul.f32 %v253, %v245
        %v255 = vmul.f32 %v253, %v246
        %258 = vrot.lane.b32.xlu0 %v254, 127
        %v259 = vpop.permute.xlu0 %258
        %260 = vrot.lane.b32.xlu0 %v255, 127
        %v261 = vpop.permute.xlu0 %260
        %v264 = vadd.f32 %v250, %v259
        %v265 = vadd.f32 %v251, %v261
        %s266 = sld [smem:[#allocation3 + $0x2]]
        %v267 = vstv %s266
        %v268 = vmul.f32 %v267, %v245
        %v269 = vmul.f32 %v267, %v246
        %272 = vrot.lane.b32.xlu0 %v268, 126
        %v273 = vpop.permute.xlu0 %272
        %274 = vrot.lane.b32.xlu0 %v269, 126
        %v275 = vpop.permute.xlu0 %274
        %v278 = vadd.f32 %v264, %v273
        %v279 = vadd.f32 %v265, %v275
        %s280 = sld [smem:[#allocation3 + $0x3]]
        %v281 = vstv %s280
        %v282 = vmul.f32 %v281, %v245
        %v283 = vmul.f32 %v281, %v246
        %286 = vrot.lane.b32.xlu0 %v282, 125
        %v287 = vpop.permute.xlu0 %286
        %288 = vrot.lane.b32.xlu0 %v283, 125
        %v289 = vpop.permute.xlu0 %288
        %v292 = vadd.f32 %v278, %v287
        %v293 = vadd.f32 %v279, %v289
        %s294 = sld [smem:[#allocation3 + $0x4]]
        %v295 = vstv %s294
        %v296 = vmul.f32 %v295, %v245
        %v297 = vmul.f32 %v295, %v246
        %300 = vrot.lane.b32.xlu0 %v296, 124
        %v301 = vpop.permute.xlu0 %300
        %302 = vrot.lane.b32.xlu0 %v297, 124
        %v303 = vpop.permute.xlu0 %302
        %v306 = vadd.f32 %v292, %v301
        %v307 = vadd.f32 %v293, %v303
        %s308 = sld [smem:[#allocation3 + $0x5]]
        %v309 = vld [vmem:[#allocation2 + $0x1] sm:$0xff]
        %v310 = vld [vmem:[#allocation2 + $0x9] sm:$0xff]
        %v311 = vstv %s308
        %v312 = vmul.f32 %v311, %v309
        %v313 = vmul.f32 %v311, %v310
        %v314 = vadd.f32 %v306, %v312
        %v315 = vadd.f32 %v307, %v313
        %s316 = sld [smem:[#allocation3 + $0x6]]
        %v317 = vstv %s316
        %v318 = vmul.f32 %v317, %v309
        %v319 = vmul.f32 %v317, %v310
        %322 = vrot.lane.b32.xlu0 %v318, 127
        %v323 = vpop.permute.xlu0 %322
        %324 = vrot.lane.b32.xlu0 %v319, 127
        %v325 = vpop.permute.xlu0 %324
        %v328 = vadd.f32 %v314, %v323
        %v329 = vadd.f32 %v315, %v325
        %s330 = sld [smem:[#allocation3 + $0x7]]
        %v331 = vstv %s330
        %v332 = vmul.f32 %v331, %v309
        %v333 = vmul.f32 %v331, %v310
        %336 = vrot.lane.b32.xlu0 %v332, 126
        %v337 = vpop.permute.xlu0 %336
        %338 = vrot.lane.b32.xlu0 %v333, 126
        %v339 = vpop.permute.xlu0 %338
        %v342 = vadd.f32 %v328, %v337
        %v343 = vadd.f32 %v329, %v339
        %s344 = sld [smem:[#allocation3 + $0x8]]
        %v345 = vstv %s344
        %v346 = vmul.f32 %v345, %v309
        %v347 = vmul.f32 %v345, %v310
        %350 = vrot.lane.b32.xlu0 %v346, 125
        %v351 = vpop.permute.xlu0 %350
        %352 = vrot.lane.b32.xlu0 %v347, 125
        %v353 = vpop.permute.xlu0 %352
        %v356 = vadd.f32 %v342, %v351
        %v357 = vadd.f32 %v343, %v353
        %s358 = sld [smem:[#allocation3 + $0x9]]
        %v359 = vstv %s358
        %v360 = vmul.f32 %v359, %v309
        %v361 = vmul.f32 %v359, %v310
        %364 = vrot.lane.b32.xlu0 %v360, 124
        %v365 = vpop.permute.xlu0 %364
        %366 = vrot.lane.b32.xlu0 %v361, 124
        %v367 = vpop.permute.xlu0 %366
        %v370 = vadd.f32 %v356, %v365
        %v371 = vadd.f32 %v357, %v367
        %s372 = sld [smem:[#allocation3 + $0xa]]
        %v373 = vld [vmem:[#allocation2 + $0x2] sm:$0xff]
        %v374 = vld [vmem:[#allocation2 + $0xa] sm:$0xff]
        %v375 = vstv %s372
        %v376 = vmul.f32 %v375, %v373
        %v377 = vmul.f32 %v375, %v374
        %v378 = vadd.f32 %v370, %v376
        %v379 = vadd.f32 %v371, %v377
        %s380 = sld [smem:[#allocation3 + $0xb]]
        %v381 = vstv %s380
        %v382 = vmul.f32 %v381, %v373
        %v383 = vmul.f32 %v381, %v374
        %386 = vrot.lane.b32.xlu0 %v382, 127
        %v387 = vpop.permute.xlu0 %386
        %388 = vrot.lane.b32.xlu0 %v383, 127
        %v389 = vpop.permute.xlu0 %388
        %v392 = vadd.f32 %v378, %v387
        %v393 = vadd.f32 %v379, %v389
        %s394 = sld [smem:[#allocation3 + $0xc]]
        %v395 = vstv %s394
        %v396 = vmul.f32 %v395, %v373
        %v397 = vmul.f32 %v395, %v374
        %400 = vrot.lane.b32.xlu0 %v396, 126
        %v401 = vpop.permute.xlu0 %400
        %402 = vrot.lane.b32.xlu0 %v397, 126
        %v403 = vpop.permute.xlu0 %402
        %v406 = vadd.f32 %v392, %v401
        %v407 = vadd.f32 %v393, %v403
        %s408 = sld [smem:[#allocation3 + $0xd]]
        %v409 = vstv %s408
        %v410 = vmul.f32 %v409, %v373
        %v411 = vmul.f32 %v409, %v374
        %414 = vrot.lane.b32.xlu0 %v410, 125
        %v415 = vpop.permute.xlu0 %414
        %416 = vrot.lane.b32.xlu0 %v411, 125
        %v417 = vpop.permute.xlu0 %416
        %v420 = vadd.f32 %v406, %v415
        %v421 = vadd.f32 %v407, %v417
        %s422 = sld [smem:[#allocation3 + $0xe]]
        %v423 = vstv %s422
        %v424 = vmul.f32 %v423, %v373
        %v425 = vmul.f32 %v423, %v374
        %428 = vrot.lane.b32.xlu0 %v424, 124
        %v429 = vpop.permute.xlu0 %428
        %430 = vrot.lane.b32.xlu0 %v425, 124
        %v431 = vpop.permute.xlu0 %430
        %v434 = vadd.f32 %v420, %v429
        %v435 = vadd.f32 %v421, %v431
        %s436 = sld [smem:[#allocation3 + $0xf]]
        %v437 = vld [vmem:[#allocation2 + $0x3] sm:$0xff]
        %v438 = vld [vmem:[#allocation2 + $0xb] sm:$0xff]
        %v439 = vstv %s436
        %v440 = vmul.f32 %v439, %v437
        %v441 = vmul.f32 %v439, %v438
        %v442 = vadd.f32 %v434, %v440
        %v443 = vadd.f32 %v435, %v441
        %s444 = sld [smem:[#allocation3 + $0x10]]
        %v445 = vstv %s444
        %v446 = vmul.f32 %v445, %v437
        %v447 = vmul.f32 %v445, %v438
        %450 = vrot.lane.b32.xlu0 %v446, 127
        %v451 = vpop.permute.xlu0 %450
        %452 = vrot.lane.b32.xlu0 %v447, 127
        %v453 = vpop.permute.xlu0 %452
        %v456 = vadd.f32 %v442, %v451
        %v457 = vadd.f32 %v443, %v453
        %s458 = sld [smem:[#allocation3 + $0x11]]
        %v459 = vstv %s458
        %v460 = vmul.f32 %v459, %v437
        %v461 = vmul.f32 %v459, %v438
        %464 = vrot.lane.b32.xlu0 %v460, 126
        %v465 = vpop.permute.xlu0 %464
        %466 = vrot.lane.b32.xlu0 %v461, 126
        %v467 = vpop.permute.xlu0 %466
        %v470 = vadd.f32 %v456, %v465
        %v471 = vadd.f32 %v457, %v467
        %s472 = sld [smem:[#allocation3 + $0x12]]
        %v473 = vstv %s472
        %v474 = vmul.f32 %v473, %v437
        %v475 = vmul.f32 %v473, %v438
        %478 = vrot.lane.b32.xlu0 %v474, 125
        %v479 = vpop.permute.xlu0 %478
        %480 = vrot.lane.b32.xlu0 %v475, 125
        %v481 = vpop.permute.xlu0 %480
        %v484 = vadd.f32 %v470, %v479
        %v485 = vadd.f32 %v471, %v481
        %s486 = sld [smem:[#allocation3 + $0x13]]
        %v487 = vstv %s486
        %v488 = vmul.f32 %v487, %v437
        %v489 = vmul.f32 %v487, %v438
        %492 = vrot.lane.b32.xlu0 %v488, 124
        %v493 = vpop.permute.xlu0 %492
        %494 = vrot.lane.b32.xlu0 %v489, 124
        %v495 = vpop.permute.xlu0 %494
        %v498 = vadd.f32 %v484, %v493
        %v499 = vadd.f32 %v485, %v495
        %s500 = sld [smem:[#allocation3 + $0x14]]
        %v501 = vld [vmem:[#allocation2 + $0x4] sm:$0xff]
        %v502 = vld [vmem:[#allocation2 + $0xc] sm:$0xff]
        %v503 = vstv %s500
        %v504 = vmul.f32 %v503, %v501
        %v505 = vmul.f32 %v503, %v502
        %v506 = vadd.f32 %v498, %v504
        %v507 = vadd.f32 %v499, %v505
        %s508 = sld [smem:[#allocation3 + $0x15]]
        %v509 = vstv %s508
        %v510 = vmul.f32 %v509, %v501
        %v511 = vmul.f32 %v509, %v502
        %514 = vrot.lane.b32.xlu0 %v510, 127
        %v515 = vpop.permute.xlu0 %514
        %516 = vrot.lane.b32.xlu0 %v511, 127
        %v517 = vpop.permute.xlu0 %516
        %v520 = vadd.f32 %v506, %v515
        %v521 = vadd.f32 %v507, %v517
        %s522 = sld [smem:[#allocation3 + $0x16]]
        %v523 = vstv %s522
        %v524 = vmul.f32 %v523, %v501
        %v525 = vmul.f32 %v523, %v502
        %528 = vrot.lane.b32.xlu0 %v524, 126
        %v529 = vpop.permute.xlu0 %528
        %530 = vrot.lane.b32.xlu0 %v525, 126
        %v531 = vpop.permute.xlu0 %530
        %v534 = vadd.f32 %v520, %v529
        %v535 = vadd.f32 %v521, %v531
        %s536 = sld [smem:[#allocation3 + $0x17]]
        %v537 = vstv %s536
        %v538 = vmul.f32 %v537, %v501
        %v539 = vmul.f32 %v537, %v502
        %542 = vrot.lane.b32.xlu0 %v538, 125
        %v543 = vpop.permute.xlu0 %542
        %544 = vrot.lane.b32.xlu0 %v539, 125
        %v545 = vpop.permute.xlu0 %544
        %v548 = vadd.f32 %v534, %v543
        %v549 = vadd.f32 %v535, %v545
        %s550 = sld [smem:[#allocation3 + $0x18]]
        %v551 = vstv %s550
        %v552 = vmul.f32 %v551, %v501
        %v553 = vmul.f32 %v551, %v502
        %556 = vrot.lane.b32.xlu0 %v552, 124
        %v557 = vpop.permute.xlu0 %556
        %558 = vrot.lane.b32.xlu0 %v553, 124
        %v559 = vpop.permute.xlu0 %558
        %v562 = vadd.f32 %v548, %v557
        %v563 = vadd.f32 %v549, %v559
        %s564 = sld [smem:[#allocation3 + $0x19]]
        %v565 = vld [vmem:[%s241] sm:$0xff]
        %v566 = vld [vmem:[%s241 + $0x8] sm:$0xff]
        %v567 = vstv %s564
        %v568 = vmul.f32 %v567, %v565
        %v569 = vmul.f32 %v567, %v566
        %v570 = vadd.f32 %v562, %v568
        %v571 = vadd.f32 %v563, %v569
        %s572 = sld [smem:[#allocation3 + $0x1a]]
        %v573 = vstv %s572
        %v574 = vmul.f32 %v573, %v565
        %v575 = vmul.f32 %v573, %v566
        %578 = vrot.lane.b32.xlu0 %v574, 127
        %v579 = vpop.permute.xlu0 %578
        %580 = vrot.lane.b32.xlu0 %v575, 127
        %v581 = vpop.permute.xlu0 %580
        %v584 = vadd.f32 %v570, %v579
        %v585 = vadd.f32 %v571, %v581
        %s586 = sld [smem:[#allocation3 + $0x1b]]
        %v587 = vstv %s586
        %v588 = vmul.f32 %v587, %v565
        %v589 = vmul.f32 %v587, %v566
        %592 = vrot.lane.b32.xlu0 %v588, 126
        %v593 = vpop.permute.xlu0 %592
        %594 = vrot.lane.b32.xlu0 %v589, 126
        %v595 = vpop.permute.xlu0 %594
        %v598 = vadd.f32 %v584, %v593
        %v599 = vadd.f32 %v585, %v595
        %s600 = sld [smem:[#allocation3 + $0x1c]]
        %v601 = vstv %s600
        %v602 = vmul.f32 %v601, %v565
        %v603 = vmul.f32 %v601, %v566
        %606 = vrot.lane.b32.xlu0 %v602, 125
        %v607 = vpop.permute.xlu0 %606
        %608 = vrot.lane.b32.xlu0 %v603, 125
        %v609 = vpop.permute.xlu0 %608
        %v612 = vadd.f32 %v598, %v607
        %v613 = vadd.f32 %v599, %v609
        %s614 = sld [smem:[#allocation3 + $0x1d]]
        %v615 = vstv %s614
        %v616 = vmul.f32 %v615, %v565
        %v617 = vmul.f32 %v615, %v566
        %620 = vrot.lane.b32.xlu0 %v616, 124
        %v621 = vpop.permute.xlu0 %620
        %622 = vrot.lane.b32.xlu0 %v617, 124
        %v623 = vpop.permute.xlu0 %622
        %v626 = vadd.f32 %v612, %v621
        %v627 = vadd.f32 %v613, %v623
        %s628 = sld [smem:[#allocation3 + $0x1e]]
        %v629 = vld [vmem:[%s241 + $0x1] sm:$0xff]
        %v630 = vld [vmem:[%s241 + $0x9] sm:$0xff]
        %v631 = vstv %s628
        %v632 = vmul.f32 %v631, %v629
        %v633 = vmul.f32 %v631, %v630
        %v634 = vadd.f32 %v626, %v632
        %v635 = vadd.f32 %v627, %v633
        %s636 = sld [smem:[#allocation3 + $0x1f]]
        %v637 = vstv %s636
        %v638 = vmul.f32 %v637, %v629
        %v639 = vmul.f32 %v637, %v630
        %642 = vrot.lane.b32.xlu0 %v638, 127
        %v643 = vpop.permute.xlu0 %642
        %644 = vrot.lane.b32.xlu0 %v639, 127
        %v645 = vpop.permute.xlu0 %644
        %v648 = vadd.f32 %v634, %v643
        %v649 = vadd.f32 %v635, %v645
        %s650 = sld [smem:[#allocation3 + $0x20]]
        %v651 = vstv %s650
        %v652 = vmul.f32 %v651, %v629
        %v653 = vmul.f32 %v651, %v630
        %656 = vrot.lane.b32.xlu0 %v652, 126
        %v657 = vpop.permute.xlu0 %656
        %658 = vrot.lane.b32.xlu0 %v653, 126
        %v659 = vpop.permute.xlu0 %658
        %v662 = vadd.f32 %v648, %v657
        %v663 = vadd.f32 %v649, %v659
        %s664 = sld [smem:[#allocation3 + $0x21]]
        %v665 = vstv %s664
        %v666 = vmul.f32 %v665, %v629
        %v667 = vmul.f32 %v665, %v630
        %670 = vrot.lane.b32.xlu0 %v666, 125
        %v671 = vpop.permute.xlu0 %670
        %672 = vrot.lane.b32.xlu0 %v667, 125
        %v673 = vpop.permute.xlu0 %672
        %v676 = vadd.f32 %v662, %v671
        %v677 = vadd.f32 %v663, %v673
        %s678 = sld [smem:[#allocation3 + $0x22]]
        %v679 = vstv %s678
        %v680 = vmul.f32 %v679, %v629
        %v681 = vmul.f32 %v679, %v630
        %684 = vrot.lane.b32.xlu0 %v680, 124
        %v685 = vpop.permute.xlu0 %684
        %686 = vrot.lane.b32.xlu0 %v681, 124
        %v687 = vpop.permute.xlu0 %686
        %v690 = vadd.f32 %v676, %v685
        %v691 = vadd.f32 %v677, %v687
        %s692 = sld [smem:[#allocation3 + $0x23]]
        %v693 = vld [vmem:[%s241 + $0x2] sm:$0xff]
        %v694 = vld [vmem:[%s241 + $0xa] sm:$0xff]
        %v695 = vstv %s692
        %v696 = vmul.f32 %v695, %v693
        %v697 = vmul.f32 %v695, %v694
        %v698 = vadd.f32 %v690, %v696
        %v699 = vadd.f32 %v691, %v697
        %s700 = sld [smem:[#allocation3 + $0x24]]
        %v701 = vstv %s700
        %v702 = vmul.f32 %v701, %v693
        %v703 = vmul.f32 %v701, %v694
        %706 = vrot.lane.b32.xlu0 %v702, 127
        %v707 = vpop.permute.xlu0 %706
        %708 = vrot.lane.b32.xlu0 %v703, 127
        %v709 = vpop.permute.xlu0 %708
        %v712 = vadd.f32 %v698, %v707
        %v713 = vadd.f32 %v699, %v709
        %s714 = sld [smem:[#allocation3 + $0x25]]
        %v715 = vstv %s714
        %v716 = vmul.f32 %v715, %v693
        %v717 = vmul.f32 %v715, %v694
        %720 = vrot.lane.b32.xlu0 %v716, 126
        %v721 = vpop.permute.xlu0 %720
        %722 = vrot.lane.b32.xlu0 %v717, 126
        %v723 = vpop.permute.xlu0 %722
        %v726 = vadd.f32 %v712, %v721
        %v727 = vadd.f32 %v713, %v723
        %s728 = sld [smem:[#allocation3 + $0x26]]
        %v729 = vstv %s728
        %v730 = vmul.f32 %v729, %v693
        %v731 = vmul.f32 %v729, %v694
        %734 = vrot.lane.b32.xlu0 %v730, 125
        %v735 = vpop.permute.xlu0 %734
        %736 = vrot.lane.b32.xlu0 %v731, 125
        %v737 = vpop.permute.xlu0 %736
        %v740 = vadd.f32 %v726, %v735
        %v741 = vadd.f32 %v727, %v737
        %s742 = sld [smem:[#allocation3 + $0x27]]
        %v743 = vstv %s742
        %v744 = vmul.f32 %v743, %v693
        %v745 = vmul.f32 %v743, %v694
        %748 = vrot.lane.b32.xlu0 %v744, 124
        %v749 = vpop.permute.xlu0 %748
        %750 = vrot.lane.b32.xlu0 %v745, 124
        %v751 = vpop.permute.xlu0 %750
        %v754 = vadd.f32 %v740, %v749
        %v755 = vadd.f32 %v741, %v751
        %s756 = sld [smem:[#allocation3 + $0x28]]
        %v757 = vld [vmem:[%s241 + $0x3] sm:$0xff]
        %v758 = vld [vmem:[%s241 + $0xb] sm:$0xff]
        %v759 = vstv %s756
        %v760 = vmul.f32 %v759, %v757
        %v761 = vmul.f32 %v759, %v758
        %v762 = vadd.f32 %v754, %v760
        %v763 = vadd.f32 %v755, %v761
        %s764 = sld [smem:[#allocation3 + $0x29]]
        %v765 = vstv %s764
        %v766 = vmul.f32 %v765, %v757
        %v767 = vmul.f32 %v765, %v758
        %770 = vrot.lane.b32.xlu0 %v766, 127
        %v771 = vpop.permute.xlu0 %770
        %772 = vrot.lane.b32.xlu0 %v767, 127
        %v773 = vpop.permute.xlu0 %772
        %v776 = vadd.f32 %v762, %v771
        %v777 = vadd.f32 %v763, %v773
        %s778 = sld [smem:[#allocation3 + $0x2a]]
        %v779 = vstv %s778
        %v780 = vmul.f32 %v779, %v757
        %v781 = vmul.f32 %v779, %v758
        %784 = vrot.lane.b32.xlu0 %v780, 126
        %v785 = vpop.permute.xlu0 %784
        %786 = vrot.lane.b32.xlu0 %v781, 126
        %v787 = vpop.permute.xlu0 %786
        %v790 = vadd.f32 %v776, %v785
        %v791 = vadd.f32 %v777, %v787
        %s792 = sld [smem:[#allocation3 + $0x2b]]
        %v793 = vstv %s792
        %v794 = vmul.f32 %v793, %v757
        %v795 = vmul.f32 %v793, %v758
        %798 = vrot.lane.b32.xlu0 %v794, 125
        %v799 = vpop.permute.xlu0 %798
        %800 = vrot.lane.b32.xlu0 %v795, 125
        %v801 = vpop.permute.xlu0 %800
        %v804 = vadd.f32 %v790, %v799
        %v805 = vadd.f32 %v791, %v801
        %s806 = sld [smem:[#allocation3 + $0x2c]]
        %v807 = vstv %s806
        %v808 = vmul.f32 %v807, %v757
        %v809 = vmul.f32 %v807, %v758
        %812 = vrot.lane.b32.xlu0 %v808, 124
        %v813 = vpop.permute.xlu0 %812
        %814 = vrot.lane.b32.xlu0 %v809, 124
        %v815 = vpop.permute.xlu0 %814
        %v818 = vadd.f32 %v804, %v813
        %v819 = vadd.f32 %v805, %v815
        %s820 = sld [smem:[#allocation3 + $0x2d]]
        %v821 = vld [vmem:[%s241 + $0x4] sm:$0xff]
        %v822 = vld [vmem:[%s241 + $0xc] sm:$0xff]
        %v823 = vstv %s820
        %v824 = vmul.f32 %v823, %v821
        %v825 = vmul.f32 %v823, %v822
        %v826 = vadd.f32 %v818, %v824
        %v827 = vadd.f32 %v819, %v825
        %s828 = sld [smem:[#allocation3 + $0x2e]]
        %v829 = vstv %s828
        %v830 = vmul.f32 %v829, %v821
        %v831 = vmul.f32 %v829, %v822
        %834 = vrot.lane.b32.xlu0 %v830, 127
        %v835 = vpop.permute.xlu0 %834
        %836 = vrot.lane.b32.xlu0 %v831, 127
        %v837 = vpop.permute.xlu0 %836
        %v840 = vadd.f32 %v826, %v835
        %v841 = vadd.f32 %v827, %v837
        %s842 = sld [smem:[#allocation3 + $0x2f]]
        %v843 = vstv %s842
        %v844 = vmul.f32 %v843, %v821
        %v845 = vmul.f32 %v843, %v822
        %848 = vrot.lane.b32.xlu0 %v844, 126
        %v849 = vpop.permute.xlu0 %848
        %850 = vrot.lane.b32.xlu0 %v845, 126
        %v851 = vpop.permute.xlu0 %850
        %v854 = vadd.f32 %v840, %v849
        %v855 = vadd.f32 %v841, %v851
        %s856 = sld [smem:[#allocation3 + $0x30]]
        %v857 = vstv %s856
        %v858 = vmul.f32 %v857, %v821
        %v859 = vmul.f32 %v857, %v822
        %862 = vrot.lane.b32.xlu0 %v858, 125
        %v863 = vpop.permute.xlu0 %862
        %864 = vrot.lane.b32.xlu0 %v859, 125
        %v865 = vpop.permute.xlu0 %864
        %v868 = vadd.f32 %v854, %v863
        %v869 = vadd.f32 %v855, %v865
        %s870 = sld [smem:[#allocation3 + $0x31]]
        %v871 = vstv %s870
        %v872 = vmul.f32 %v871, %v821
        %v873 = vmul.f32 %v871, %v822
        %876 = vrot.lane.b32.xlu0 %v872, 124
        %v877 = vpop.permute.xlu0 %876
        %878 = vrot.lane.b32.xlu0 %v873, 124
        %v879 = vpop.permute.xlu0 %878
        %v882 = vadd.f32 %v868, %v877
        %v883 = vadd.f32 %v869, %v879
        %v884 = vmax.f32 %v882, 0.0
        %v885 = vmax.f32 %v883, 0.0
        %v886 = vxor.u32 %v884, 2147483648
        %v887 = vxor.u32 %v885, 2147483648
        %v888 = vmul.f32 %v886, 1.442695
        %v889 = vpow.pop %v888
        %v890 = vmul.f32 %v887, 1.442695
        %v891 = vpow.pop %v890
        %v892 = vadd.f32 %v889, 1.0
        %v893 = vadd.f32 %v891, 1.0
        %v894 = vrcp.pop %v892
        %v895 = vmul.f32 1.0, %v894
        %v896 = vrcp.pop %v893
        %v897 = vmul.f32 1.0, %v896
        %v898 = vmul.f32 %v174, %v895
        %v899 = vmul.f32 %v175, %v897
        %v900 = vmul.f32 %v176, %v895
        %v901 = vmul.f32 %v177, %v897
        %v902 = vmul.f32 %v178, %v895
        %v903 = vmul.f32 %v179, %v897
        %v904 = vmul.f32 %v180, %v895
        %v905 = vmul.f32 %v181, %v897
        %906 = vst.msk [vmem:[%s173] sm:$0xff] %vm182, %v898
        %907 = vst.msk [vmem:[%s173 + $0x8] sm:$0xff] %vm182, %v899
        %908 = vst.msk [vmem:[%s173 + $0x10] sm:$0xff] %vm182, %v900
        %909 = vst.msk [vmem:[%s173 + $0x18] sm:$0xff] %vm182, %v901
        %910 = vst.msk [vmem:[%s173 + $0x20] sm:$0xff] %vm182, %v902
        %911 = vst.msk [vmem:[%s173 + $0x28] sm:$0xff] %vm182, %v903
        %912 = vst.msk [vmem:[%s173 + $0x30] sm:$0xff] %vm182, %v904
        %913 = vst.msk [vmem:[%s173 + $0x38] sm:$0xff] %vm182, %v905
        %s914 = sand.u32 %s75, 1
        %s915 = scalar_lea.sflag [#allocation5], %s914
        %s916 = sand.u32 %s75, 1
        %s917 = smul.addr %s916, 64
        %s918 = scalar_lea.vmem [#allocation8], %s917
        // Predicated region
        $region37: #{tpu_custom_call.1} parent=27 // pred_check
          %p919 = pneg %p85
        $region38: #{tpu_custom_call.1} parent=27 // pred_check_branch
          %921 = sbr.rel (%p919) target = $region40
        $region39: #{tpu_custom_call.1} parent=27 // pred_region
          %s923 = ssub.s32 1024, 1024
          %924 = vsyncadd %s915, %s923
          %s925 = smul.addr %s20, 8
          %s926 = smul.addr %s925, 128
          %s927 = scalar_lea.hbm %s2, %s926
          %s928 = sshll.u32 %s918, 4
          %s929 = int_to_ptr.vmem [resolvable:$true] %s928
          %934 = dma.vmem_to_hbm [thread:$0]  %s929, 1024, %s927, %s915, 128, 128, 8
        $region40: #{tpu_custom_call.1} parent=27 // pred_fallthru
          _
      $region28: #{tpu_custom_call.1} parent=5 // pred_fallthru
        _
      %p935 = scmp.le.s32.totalorder 2, %s15
      // Predicated region
      $region41: #{tpu_custom_call.1} parent=5 // pred_check
        %p936 = pneg %p935
      $region42: #{tpu_custom_call.1} parent=5 // pred_check_branch
        %938 = sbr.rel (%p936) target = $region44
      $region43: #{tpu_custom_call.1} parent=5 // pred_region
        %s939 = ssub.s32 %s15, 2
        // Predicated region
        $region45: #{tpu_custom_call.1} parent=43 // pred_check
          %p940 = pneg %p91
        $region46: #{tpu_custom_call.1} parent=43 // pred_check_branch
          %942 = sbr.rel (%p940) target = $region48
        $region47: #{tpu_custom_call.1} parent=43 // pred_region
          %s943 = sand.u32 %s76, 1
          %s944 = scalar_lea.sflag [#allocation5], %s943
          %s945 = sand.u32 %s76, 1
          %s946 = smul.addr %s945, 64
          %s947 = scalar_lea.vmem [#allocation8], %s946
          %948 = dma.done %s944, 1024
        $region48: #{tpu_custom_call.1} parent=43 // pred_fallthru
          _
      $region44: #{tpu_custom_call.1} parent=5 // pred_fallthru
        _
    $region6: #{tpu_custom_call.1} parent=1 // loop_footer
      %s19 = sadd.s32 1, %s15
    $region7: #{tpu_custom_call.1} parent=1 // loop_footer_branch
      %14 = sbr.rel target = $region3
    $region8: #{tpu_custom_call.1} parent=1 // loop_exit
      _
    %949 = vsyncpa [#allocation4], 1
    %s950 = scalar_lea.sflag [#allocation4], 1
    %951 = vsyncpa %s950, 1
    %952 = vsyncpa [#allocation5], 1
    %s953 = scalar_lea.sflag [#allocation5], 1
    %954 = vsyncpa %s953, 1
    %955 = vsyncpa [#allocation6], 1
    %s956 = scalar_lea.sflag [#allocation6], 1
    %957 = vsyncpa %s956, 1

// kernel: tpu_custom_call.1
$region0: #{tpu_custom_call.1}
  #allocation0 [shape = 'u32[]', space=smem, size = 0x4, offset = 0x4, fixed_abs, tag = 'smem constant byte address 0x4 - core index']
  #allocation1 [shape = 'u32[144,128]{1,0:T(1,128)}', space=vmem, size = 0x12000, scoped, tag = 'internal scratch']
  %s0 = inlined_call_operand.hbm [shape: f32[2,4,256], index: 0, kind: input, shape index: {}]
  %s1 = inlined_call_operand.hbm [shape: f32[2,2,256], index: 1, kind: output, shape index: {}]
  %s2 = sld [smem:[#allocation0]]
  $region41: #{tpu_custom_call.1} parent=0
    _
  %s4 = ssub.s32 1, %s2
  %s5 = scalar_select 0, %s4, %s2
  $region1: #{tpu_custom_call.1} parent=0
    #allocation2 [shape = 'u8[8192]{0}', space=vmem, size = 0x2000, scoped, tag = 'input window, operand 0']
    #allocation3 [shape = 's32[2]{0}', space=sflag, size = 0x8, scoped, tag = 'scoped memory for tpu_custom_call.1']
    #allocation4 [shape = 's32[2]{0}', space=sflag, size = 0x8, scoped, tag = 'scoped memory for tpu_custom_call.1']
    #allocation5 [shape = 'u8[4096]{0}', space=vmem, size = 0x1000, scoped, tag = 'output window, operand 0']
    %6 = vsyncpa [#allocation3], 0
    %s7 = scalar_lea.sflag [#allocation3], 1
    %8 = vsyncpa %s7, 0
    %9 = vsyncpa [#allocation4], 0
    %s10 = scalar_lea.sflag [#allocation4], 1
    %11 = vsyncpa %s10, 0
    loop: start=0, step=1, limit=4
    $region2: #{tpu_custom_call.1} parent=1 // loop_pre_header
      _
    $region3: #{tpu_custom_call.1} parent=1 // loop_header
      %s13 = sphi 0, %s17
      %p14 = scmp.ge.s32.totalorder %s13, 4
      %s20 = sphi 0, %s32
      %s21 = sphi 0, %s28
      %s22 = sphi 0, %s20
      %s23 = sphi 0, %s21
      %s24 = sphi 0, %s22
      %s25 = sphi 0, %s23
      %s37 = sphi 0, %s39
      %s40 = sphi 0, %s37
      %s41 = sphi 0, %s40
      %s57 = sphi 0, %s41
      %s65 = sphi 0, %s67
      %s68 = sphi 0, %s65
      %s69 = sphi 0, %s68
      %s85 = sphi 0, %s69
    $region4: #{tpu_custom_call.1} parent=1 // loop_header_branch
      %16 = sbr.rel (%p14) target = $region8
    $region5: #{tpu_custom_call.1} parent=1 // loop_body
      %s18 = ssub.s32 %s13, 1
      %s19 = ssub.s32 %s13, 2
      %s26 = sadd.s32 1, %s21
      %p27 = scmp.ge.s32.totalorder %s26, 1
      %s28 = scalar_select %p27, 0, %s26
      %s29 = sadd.s32 1, %s20
      %s30 = scalar_select %p27, %s29, %s20
      %p31 = scmp.ge.s32.totalorder %s30, 2
      %s32 = scalar_select %p31, 0, %s30
      %s33 = ssub.s32 %s20, %s32
      %s34 = ssub.s32 %s21, %s28
      %s35 = sor.u32 %s33, %s34
      %p36 = scmp.eq.s32.totalorder %s35, 0
      %s38 = sadd.s32 %s37, 1
      %s39 = scalar_select %p36, %s37, %s38
      %p42 = pneg %p36
      %p43 = scmp.eq.s32.totalorder %s13, 1
      %p44 = por %p42, %p43
      %p45 = scmp.ne.s32.totalorder %s37, %s40
      %p46 = scmp.eq.s32.totalorder %s13, 0
      %p47 = por %p45, %p46
      %p48 = scmp.ne.s32.totalorder %s37, %s40
      %p49 = scmp.eq.s32.totalorder %s18, 1
      %p50 = por %p48, %p49
      %p51 = scmp.ne.s32.totalorder %s40, %s41
      %p52 = scmp.eq.s32.totalorder %s18, 0
      %p53 = por %p51, %p52
      %p54 = scmp.ne.s32.totalorder %s40, %s41
      %p55 = scmp.eq.s32.totalorder %s19, 1
      %p56 = por %p54, %p55
      %p58 = scmp.ne.s32.totalorder %s41, %s57
      %p59 = scmp.eq.s32.totalorder %s19, 0
      %p60 = por %p58, %p59
      %s61 = ssub.s32 %s20, %s32
      %s62 = ssub.s32 %s21, %s28
      %s63 = sor.u32 %s61, %s62
      %p64 = scmp.eq.s32.totalorder %s63, 0
      %s66 = sadd.s32 %s65, 1
      %s67 = scalar_select %p64, %s65, %s66
      %p70 = pneg %p64
      %p71 = scmp.eq.s32.totalorder %s13, 1
      %p72 = por %p70, %p71
      %p73 = scmp.ne.s32.totalorder %s65, %s68
      %p74 = scmp.eq.s32.totalorder %s13, 0
      %p75 = por %p73, %p74
      %p76 = scmp.ne.s32.totalorder %s65, %s68
      %p77 = scmp.eq.s32.totalorder %s18, 1
      %p78 = por %p76, %p77
      %p79 = scmp.ne.s32.totalorder %s68, %s69
      %p80 = scmp.eq.s32.totalorder %s18, 0
      %p81 = por %p79, %p80
      %p82 = scmp.ne.s32.totalorder %s68, %s69
      %p83 = scmp.eq.s32.totalorder %s19, 1
      %p84 = por %p82, %p83
      %p86 = scmp.ne.s32.totalorder %s69, %s85
      %p87 = scmp.eq.s32.totalorder %s19, 0
      %p88 = por %p86, %p87
      %p89 = scmp.le.s32.totalorder 1, %s13
      %p90 = scmp.lt.s32.totalorder %s13, 3
      %p91 = pnand %p89, %p90
      %p92 = pneg %p91
      // Predicated region
      $region9: #{tpu_custom_call.1} parent=5 // pred_check
        _
      $region10: #{tpu_custom_call.1} parent=5 // pred_check_branch
        %94 = sbr.rel (%p91) target = $region12
      $region11: #{tpu_custom_call.1} parent=5 // pred_region
        %s95 = ssub.s32 %s13, 1
      $region12: #{tpu_custom_call.1} parent=5 // pred_fallthru
        _
      %p96 = scmp.lt.s32.totalorder %s13, 2
      // Predicated region
      $region13: #{tpu_custom_call.1} parent=5 // pred_check
        %p97 = pneg %p96
      $region14: #{tpu_custom_call.1} parent=5 // pred_check_branch
        %99 = sbr.rel (%p97) target = $region16
      $region15: #{tpu_custom_call.1} parent=5 // pred_region
        // Predicated region
        $region17: #{tpu_custom_call.1} parent=15 // pred_check
          %p100 = pneg %p47
        $region18: #{tpu_custom_call.1} parent=15 // pred_check_branch
          %102 = sbr.rel (%p100) target = $region20
        $region19: #{tpu_custom_call.1} parent=15 // pred_region
          %s103 = sand.u32 %s37, 1
          %s104 = scalar_lea.sflag [#allocation3], %s103
          %s105 = sand.u32 %s37, 1
          %s106 = smul.addr %s105, 8
          %s107 = scalar_lea.vmem [#allocation2], %s106
          %s108 = smul.u32 2, %s21
          %s110 = ssub.s32 128, 128
          %111 = vsyncadd %s104, %s110
          %s112 = smul.addr %s20, 2
          %s113 = sadd.s32 %s108, %s112
          %s114 = smul.addr %s113, 64
          %s115 = scalar_lea.hbm %s0, %s114
          %s117 = sshll.u32 %s107, 4
          %s118 = int_to_ptr.vmem [resolvable:$true] %s117
          %120 = dma.hbm_to_vmem [thread:$0]  %s115, 128, %s118, %s104
        $region20: #{tpu_custom_call.1} parent=15 // pred_fallthru
          _
      $region16: #{tpu_custom_call.1} parent=5 // pred_fallthru
        _
      %p121 = scmp.le.s32.totalorder 1, %s13
      %p122 = scmp.lt.s32.totalorder %s13, 3
      %p123 = pnand %p121, %p122
      %p124 = pneg %p123
      // Predicated region
      $region21: #{tpu_custom_call.1} parent=5 // pred_check
        _
      $region22: #{tpu_custom_call.1} parent=5 // pred_check_branch
        %126 = sbr.rel (%p123) target = $region24
      $region23: #{tpu_custom_call.1} parent=5 // pred_region
        %s127 = ssub.s32 %s13, 1
        %s128 = sand.u32 %s40, 1
        %s129 = scalar_lea.sflag [#allocation3], %s128
        %s130 = sand.u32 %s40, 1
        %s131 = smul.addr %s130, 8
        %s132 = scalar_lea.vmem [#allocation2], %s131
        // Predicated region
        $region25: #{tpu_custom_call.1} parent=23 // pred_check
          %p133 = pneg %p53
        $region26: #{tpu_custom_call.1} parent=23 // pred_check_branch
          %135 = sbr.rel (%p133) target = $region28
        $region27: #{tpu_custom_call.1} parent=23 // pred_region
          %136 = dma.done %s129, 128
        $region28: #{tpu_custom_call.1} parent=23 // pred_fallthru
          _
        %s137 = sand.u32 %s40, 1
        %s138 = scalar_lea.sflag [#allocation3], %s137
        %s139 = sand.u32 %s40, 1
        %s140 = smul.addr %s139, 8
        %s141 = scalar_lea.vmem [#allocation2], %s140
        %p142 = pneg %p53
        %p143 = pneg %p50
        %p144 = pneg %p81
        %p145 = pneg %p78
        %s146 = sand.u32 %s68, 1
        %s147 = scalar_lea.sflag [#allocation4], %s146
        %s148 = sand.u32 %s68, 1
        %s149 = smul.addr %s148, 4
        %s150 = scalar_lea.vmem [#allocation5], %s149
        %s151 = smul.u32 2, %s23
        %s152 = smul.u32 2, %s23
        %v153 = vld [vmem:[%s132] sm:$0xff]
        %v155 = vcombine.high %v153, %v153
        %vm157 = vcmask 1043456
        %v158 = vsel %vm157, %v153, -inf
        %v159 = vrot.slane %v158, 4
        %v160 = vmax.f32 %v158, %v159
        %v161 = vrot.slane %v160, 2
        %v162 = vmax.f32 %v160, %v161
        %v163 = vrot.slane %v162, 1
        %v164 = vmax.f32 %v162, %v163
        %v165 = vsel %vm157, %v155, -inf
        %v166 = vrot.slane %v165, 4
        %v167 = vmax.f32 %v165, %v166
        %v168 = vrot.slane %v167, 2
        %v169 = vmax.f32 %v167, %v168
        %v170 = vrot.slane %v169, 1
        %v171 = vmax.f32 %v169, %v170
        %v174 = vcombine.low %v164, %v171
        %v176 = vunpack.c.l.s4 1966171168
        %v177 = vunpack.c.0.s8 %v176
        %v178 = vlaneseq
        %v179 = vshrl.u32 %v178, 7
        %v180 = vsub.s32 %v177, %v179
        %v181 = vrot.slane %v174, %v180
        %v183 = vunpack.c.l.s4 1966171168
        %v184 = vunpack.c.0.s8 %v183
        %v185 = vlaneseq
        %v186 = vshrl.u32 %v185, 7
        %v187 = vsub.s32 %v184, %v186
        %v188 = vrot.slane %v181, %v187
        %v190 = vlaneseq
        %vm191 = vcmp.ge.s32.totalorder %v190, 0
        %vm192 = vcmp.lt.s32.totalorder %v190, 256
        %vm193 = vmand %vm191, %vm192
        %194 = vst.msk [vmem:[%s150] ss:$2 sm:$0x3] %vm193, %v188
        %v195 = vsel %vm157, %v153, 0.0
        %v196 = vrot.slane %v195, 4
        %v197 = vadd.f32 %v195, %v196
        %v198 = vrot.slane %v197, 2
        %v199 = vadd.f32 %v197, %v198
        %v200 = vrot.slane %v199, 1
        %v201 = vadd.f32 %v199, %v200
        %v202 = vsel %vm157, %v155, 0.0
        %v203 = vrot.slane %v202, 4
        %v204 = vadd.f32 %v202, %v203
        %v205 = vrot.slane %v204, 2
        %v206 = vadd.f32 %v204, %v205
        %v207 = vrot.slane %v206, 1
        %v208 = vadd.f32 %v206, %v207
        %v209 = vrcp.pop 4.0
        %v210 = vmul.f32 %v201, %v209
        %v211 = vmul.f32 %v208, %v209
        %v214 = vcombine.low %v210, %v211
        %v216 = vunpack.c.l.s4 1966171168
        %v217 = vunpack.c.0.s8 %v216
        %v218 = vlaneseq
        %v219 = vshrl.u32 %v218, 7
        %v220 = vsub.s32 %v217, %v219
        %v221 = vrot.slane %v214, %v220
        %v223 = vunpack.c.l.s4 1966171168
        %v224 = vunpack.c.0.s8 %v223
        %v225 = vlaneseq
        %v226 = vshrl.u32 %v225, 7
        %v227 = vsub.s32 %v224, %v226
        %v228 = vrot.slane %v221, %v227
        %s230 = scalar_lea.vmem %s150, 1 [#allocation5]
        %231 = vst.msk [vmem:[%s230] ss:$2 sm:$0x3] %vm193, %v228
        %s232 = sand.u32 %s68, 1
        %s233 = scalar_lea.sflag [#allocation4], %s232
        %s234 = sand.u32 %s68, 1
        %s235 = smul.addr %s234, 4
        %s236 = scalar_lea.vmem [#allocation5], %s235
        // Predicated region
        $region29: #{tpu_custom_call.1} parent=23 // pred_check
          %p237 = pneg %p78
        $region30: #{tpu_custom_call.1} parent=23 // pred_check_branch
          %239 = sbr.rel (%p237) target = $region32
        $region31: #{tpu_custom_call.1} parent=23 // pred_region
          %s240 = smul.u32 2, %s23
          %s242 = ssub.s32 64, 64
          %243 = vsyncadd %s233, %s242
          %s244 = smul.addr %s22, 2
          %s245 = sadd.s32 %s240, %s244
          %s246 = smul.addr %s245, 32
          %s247 = scalar_lea.hbm %s1, %s246
          %s249 = sshll.u32 %s236, 4
          %s250 = int_to_ptr.vmem [resolvable:$true] %s249
          %252 = dma.vmem_to_hbm [thread:$0]  %s250, 64, %s247, %s233
        $region32: #{tpu_custom_call.1} parent=23 // pred_fallthru
          _
      $region24: #{tpu_custom_call.1} parent=5 // pred_fallthru
        _
      %p253 = scmp.le.s32.totalorder 2, %s13
      // Predicated region
      $region33: #{tpu_custom_call.1} parent=5 // pred_check
        %p254 = pneg %p253
      $region34: #{tpu_custom_call.1} parent=5 // pred_check_branch
        %256 = sbr.rel (%p254) target = $region36
      $region35: #{tpu_custom_call.1} parent=5 // pred_region
        %s257 = ssub.s32 %s13, 2
        // Predicated region
        $region37: #{tpu_custom_call.1} parent=35 // pred_check
          %p258 = pneg %p84
        $region38: #{tpu_custom_call.1} parent=35 // pred_check_branch
          %260 = sbr.rel (%p258) target = $region40
        $region39: #{tpu_custom_call.1} parent=35 // pred_region
          %s261 = sand.u32 %s69, 1
          %s262 = scalar_lea.sflag [#allocation4], %s261
          %s263 = sand.u32 %s69, 1
          %s264 = smul.addr %s263, 4
          %s265 = scalar_lea.vmem [#allocation5], %s264
          %266 = dma.done %s262, 64
        $region40: #{tpu_custom_call.1} parent=35 // pred_fallthru
          _
      $region36: #{tpu_custom_call.1} parent=5 // pred_fallthru
        _
    $region6: #{tpu_custom_call.1} parent=1 // loop_footer
      %s17 = sadd.s32 1, %s13
    $region7: #{tpu_custom_call.1} parent=1 // loop_footer_branch
      %12 = sbr.rel target = $region3
    $region8: #{tpu_custom_call.1} parent=1 // loop_exit
      _
    %267 = vsyncpa [#allocation3], 1
    %s268 = scalar_lea.sflag [#allocation3], 1
    %269 = vsyncpa %s268, 1
    %270 = vsyncpa [#allocation4], 1
    %s271 = scalar_lea.sflag [#allocation4], 1
    %272 = vsyncpa %s271, 1

</llo_original>
